<compile_context>
chip_gen: v6e
topology: v6e:2x2x1
jax: 0.10.0
libtpu: 0.0.40
codegen_flags: <defaults>
</compile_context>

<pallas_src>
import numpy as np
import jax
import jax.numpy as jnp
from jax.experimental import pallas as pl
from jax.experimental.pallas import tpu as pltpu


SIZES = (1, 2, 3, 6)


# ----------------------------------------------------------------------------
# Generation-aware tile / VMEM policy
# ----------------------------------------------------------------------------
def _ceil_to(x, m):
    return ((x + m - 1) // m) * m


def _vmem_policy():
    """(hw_tile_cap, vmem_limit_bytes) based on this chip's physical VMEM."""
    phys = 128 * 1024 * 1024
    try:
        phys = int(getattr(pltpu.get_tpu_info(), "vmem_capacity_bytes", phys))
    except Exception:
        pass
    if phys <= 80 * 1024 * 1024:                 # v7x-class: 64 MiB per core
        return 2048, 48 * 1024 * 1024
    return 4096, 96 * 1024 * 1024                # v5e / v6e: 128 MiB


def _kernels_vmem_bytes(C, S, F, ncp, thw):
    """Conservative (everything double-buffered) VMEM estimate for both kernels."""
    # Kernel A: x(bf16), P(bf16), z-out(bf16) blocks + stage weights + scratch.
    a = 2 * (C * thw * 2 + thw * ncp * 2 + F * ncp * 2)
    a += 2 * (S * C * 2 + S * 4 + S * ncp * 2 + F * S * 2)
    a += C * ncp * 4                                           # pooled_acc scratch
    # Kernel B: x(bf16), U(bf16), out(f32) blocks + weights / z / bias.
    b = 2 * (C * thw * 2 + ncp * thw * 2 + F * thw * 4)
    b += 2 * (F * C * 2 + F * ncp * 2 + F * 4)
    return max(a, b)


def _pick_hw_tile(hw, C, S, F, ncp, cap, vmem_limit):
    """Largest 128-multiple tile <= cap that fits the VMEM budget, allowing at
    most ~10% H*W zero-padding over the minimum achievable padding."""
    cands = [t for t in range(128, cap + 1, 128)
             if _kernels_vmem_bytes(C, S, F, ncp, t) <= vmem_limit]
    if not cands:
        return 128, _ceil_to(hw, 128)
    min_pad = min(_ceil_to(hw, t) for t in cands)
    budget = int(min_pad * 1.10)
    best = max(t for t in cands if _ceil_to(hw, t) <= budget)
    return best, _ceil_to(hw, best)


# ----------------------------------------------------------------------------
# Pallas kernels (channels-first layout, HW and cell axes lane-dense)
# ----------------------------------------------------------------------------
def _stage_kernel(x_ref, p_ref, w_ref, b_ref, m_ref, wz_ref, z_ref, pooled_acc):
    """Fused PSP stage path for one image.

    pooled = feats @ P                  (adaptive avg-pool, all sizes at once)
    y      = relu(W_all @ pooled + b)   (4 x [1x1 conv + BN + ReLU], BN folded)
    z      = Wz @ (y * stage_mask)      (bottleneck stage slices, pre-upsample)

    Grid: (N, HW_tiles); the HW axis is a reduction into `pooled_acc`.
    """
    t = pl.program_id(1)

    @pl.when(t == 0)
    def _():
        pooled_acc[...] = jnp.zeros_like(pooled_acc)

    # (C, THW) @ (THW, NCP) -> (C, NCP), f32 accumulation on the MXU.
    pooled_acc[...] += jnp.dot(x_ref[0], p_ref[...],
                               preferred_element_type=jnp.float32)

    @pl.when(t == pl.num_programs(1) - 1)
    def _():
        pooled = pooled_acc[...].astype(jnp.bfloat16)
        # all four stage convs in one (S, C) @ (C, NCP) matmul (S = 4*Cout)
        y = jnp.dot(w_ref[...], pooled, preferred_element_type=jnp.float32)
        y = jnp.maximum(y + b_ref[...], 0.0)                   # BN bias + ReLU
        y = (y * m_ref[...].astype(jnp.float32)).astype(jnp.bfloat16)
        # bottleneck stage slice at low resolution: (F, S) @ (S, NCP)
        z_ref[0] = jnp.dot(wz_ref[...], y,
                           preferred_element_type=jnp.float32).astype(jnp.bfloat16)


def _bottleneck_kernel(x_ref, w_ref, z_ref, u_ref, b_ref, o_ref):
    """out = relu(W_feats @ feats + z @ U_tile + bias) for one (image, HW tile).

    The z @ U_tile matmul IS the bilinear upsample of all four pyramid priors
    (U holds align_corners=True interpolation weights), fused into the
    memory-bound identity-branch matmul so no prior tensor touches HBM.
    """
    acc = jnp.dot(w_ref[...], x_ref[0], preferred_element_type=jnp.float32)
    acc = acc + jnp.dot(z_ref[0], u_ref[...], preferred_element_type=jnp.float32)
    o_ref[0] = jnp.maximum(acc + b_ref[...], 0.0).astype(o_ref.dtype)


# ----------------------------------------------------------------------------
# pallas_call wrappers
# ----------------------------------------------------------------------------
def _fused_stage_call(feats_cf, packed):
    N, C, hw_pad = feats_cf.shape
    thw, ncp = packed["thw"], packed["ncp"]
    S = packed["w_all"].shape[0]
    F = packed["wz"].shape[0]
    return pl.pallas_call(
        _stage_kernel,
        out_shape=jax.ShapeDtypeStruct((N, F, ncp), jnp.bfloat16),
        grid_spec=pltpu.PrefetchScalarGridSpec(
            num_scalar_prefetch=0,
            grid=(N, hw_pad // thw),
            in_specs=[
                pl.BlockSpec((1, C, thw), lambda n, t: (n, 0, t)),
                pl.BlockSpec((thw, ncp), lambda n, t: (t, 0)),
                pl.BlockSpec((S, C), lambda n, t: (0, 0)),
                pl.BlockSpec((S, 1), lambda n, t: (0, 0)),
                pl.BlockSpec((S, ncp), lambda n, t: (0, 0)),
                pl.BlockSpec((F, S), lambda n, t: (0, 0)),
            ],
            out_specs=pl.BlockSpec((1, F, ncp), lambda n, t: (n, 0, 0)),
            scratch_shapes=[pltpu.VMEM((C, ncp), jnp.float32)],
        ),
        # NOTE: for N==1 inference on a 2-TensorCore chip the only parallel
        # axis of this kernel has extent 1 — batch >= 2 keeps both cores busy.
        compiler_params=pltpu.CompilerParams(
            dimension_semantics=("parallel", "arbitrary"),
            vmem_limit_bytes=packed["vmem_limit"]),
    )(feats_cf, packed["p_all"], packed["w_all"], packed["b_all"],
      packed["mask"], packed["wz"])


def _bottleneck_call(feats_cf, z, packed):
    N, C, hw_pad = feats_cf.shape
    thw, ncp = packed["thw"], packed["ncp"]
    F = packed["w_feats"].shape[0]
    return pl.pallas_call(
        _bottleneck_kernel,
        out_shape=jax.ShapeDtypeStruct((N, F, hw_pad), jnp.float32),
        grid_spec=pltpu.PrefetchScalarGridSpec(
            num_scalar_prefetch=0,
            grid=(N, hw_pad // thw),
            in_specs=[
                pl.BlockSpec((1, C, thw), lambda n, t: (n, 0, t)),
                pl.BlockSpec((F, C), lambda n, t: (0, 0)),
                pl.BlockSpec((1, F, ncp), lambda n, t: (n, 0, 0)),
                pl.BlockSpec((ncp, thw), lambda n, t: (0, t)),
                pl.BlockSpec((F, 1), lambda n, t: (0, 0)),
            ],
            out_specs=pl.BlockSpec((1, F, thw), lambda n, t: (n, 0, t)),
        ),
        compiler_params=pltpu.CompilerParams(
            dimension_semantics=("parallel", "parallel"),
            vmem_limit_bytes=packed["vmem_limit"]),
    )(feats_cf, packed["w_feats"], z, packed["u_all"], packed["bias_b"])


# ----------------------------------------------------------------------------
# Parameter prep (synthetic weights + BN stats, folded for the kernels)
# ----------------------------------------------------------------------------
def _rand_bn(key, c):
    k1, k2, k3, k4 = jax.random.split(key, 4)
    return {"gamma": 1.0 + 0.2 * jax.random.normal(k1, (c,), jnp.float32),
            "beta": 0.1 * jax.random.normal(k2, (c,), jnp.float32),
            "mean": 0.1 * jax.random.normal(k3, (c,), jnp.float32),
            "var": 1.0 + 0.2 * jax.random.uniform(k4, (c,), jnp.float32)}


def init_psp_params(key, in_features, out_features, sizes):
    """Synthetic PSPModule parameters in PyTorch layout (conv weight = (Cout, Cin))."""
    eps = 1e-5
    c4 = in_features // 4
    keys = jax.random.split(key, len(sizes) + 1)
    stages = []
    for i, _s in enumerate(sizes):
        kw_, kb_ = jax.random.split(keys[i])
        stages.append({
            "w": 0.05 * jax.random.normal(kw_, (c4, in_features), jnp.float32),
            "bn": _rand_bn(kb_, c4),
        })
    kw_, kb_ = jax.random.split(keys[-1])
    cat_ch = c4 * len(sizes) + in_features     # channels of torch.cat(priors, 1)
    wb = 0.05 * jax.random.normal(kw_, (out_features, cat_ch), jnp.float32)
    return {"stages": stages, "wb": wb, "bnb": _rand_bn(kb_, out_features),
            "sizes": tuple(sizes), "eps": eps}


def _adaptive_pool_matrix(H, W, sizes):
    """(H*W, sum(s*s)) matrix whose columns are AdaptiveAvgPool2d cell weights
    (PyTorch floor/ceil window bounds, so correct for non-divisible H, W)."""
    cols, offsets, off = [], [], 0
    for s in sizes:
        offsets.append(off)
        hb = [(int(np.floor(i * H / s)), int(np.ceil((i + 1) * H / s))) for i in range(s)]
        wbnd = [(int(np.floor(j * W / s)), int(np.ceil((j + 1) * W / s))) for j in range(s)]
        for (h0, h1) in hb:
            for (w0, w1) in wbnd:
                col = np.zeros((H, W), np.float32)
                col[h0:h1, w0:w1] = 1.0 / ((h1 - h0) * (w1 - w0))
                cols.append(col.reshape(-1))
                off += 1
    return np.stack(cols, axis=1), tuple(offsets)


def _bilinear_upsample_matrix(H, W, sizes):
    """(sum(s*s), H*W) matrix U with F.upsample(mode='bilinear',
    align_corners=True) weights: sum_i upsample(z_i) == z @ U."""
    n_cells = sum(s * s for s in sizes)
    U = np.zeros((n_cells, H * W), np.float32)
    off = 0
    for s in sizes:
        for h in range(H):
            y = h * (s - 1) / (H - 1) if H > 1 else 0.0
            y0 = min(int(np.floor(y)), max(s - 2, 0))
            wy = y - y0
            for w_ in range(W):
                x = w_ * (s - 1) / (W - 1) if W > 1 else 0.0
                x0 = min(int(np.floor(x)), max(s - 2, 0))
                wx = x - x0
                p = h * W + w_
                if s == 1:
                    U[off, p] = 1.0
                    continue
                c00 = off + y0 * s + x0
                U[c00, p] += (1.0 - wy) * (1.0 - wx)
                U[c00 + 1, p] += (1.0 - wy) * wx
                U[c00 + s, p] += wy * (1.0 - wx)
                U[c00 + s + 1, p] += wy * wx
        off += s * s
    return U


def pack_psp_params(params, H, W):
    """Fold BN scales into weights, concatenate per-stage tensors, and build the
    lane-dense (zero-padded) pooling / upsample / mask matrices for the kernels."""
    eps, sizes = params["eps"], params["sizes"]
    c4, C = params["stages"][0]["w"].shape
    S = c4 * len(sizes)
    F = params["wb"].shape[0]

    def bn_fold(bn):
        scale = bn["gamma"] / jnp.sqrt(bn["var"] + eps)
        return scale, bn["beta"] - bn["mean"] * scale

    w_rows, b_rows = [], []
    for st in params["stages"]:
        scale, bias = bn_fold(st["bn"])
        w_rows.append(st["w"] * scale[:, None])              # BN scale -> conv rows
        b_rows.append(bias)
    w_all = jnp.concatenate(w_rows, axis=0)                  # (S, C)
    b_all = jnp.concatenate(b_rows, axis=0)[:, None]         # (S, 1)

    scale_b, bias_b = bn_fold(params["bnb"])
    wb = params["wb"] * scale_b[:, None]                     # bottleneck, BN folded
    wz = wb[:, :S]                                           # (F, S) stage slices
    w_feats = wb[:, S:]                                      # (F, C) identity branch

    # --- lane-dense padded matrices ------------------------------------------
    hw = H * W
    n_cells = sum(s * s for s in sizes)
    ncp = max(128, _ceil_to(n_cells, 128))                   # padded cell axis
    cap, vmem_limit = _vmem_policy()
    thw, hw_pad = _pick_hw_tile(hw, C, S, F, ncp, cap, vmem_limit)

    p_np, cell_off = _adaptive_pool_matrix(H, W, sizes)      # (hw, n_cells)
    p_pad = np.zeros((hw_pad, ncp), np.float32)
    p_pad[:hw, :n_cells] = p_np

    u_np = _bilinear_upsample_matrix(H, W, sizes)            # (n_cells, hw)
    u_pad = np.zeros((ncp, hw_pad), np.float32)
    u_pad[:n_cells, :hw] = u_np

    mask = np.zeros((S, ncp), np.float32)
    for i, s in enumerate(sizes):
        mask[i * c4:(i + 1) * c4, cell_off[i]:cell_off[i] + s * s] = 1.0

    return {"p_all": jnp.asarray(p_pad, dtype=jnp.bfloat16),
            "u_all": jnp.asarray(u_pad, dtype=jnp.bfloat16),
            "mask": jnp.asarray(mask, dtype=jnp.bfloat16),
            "w_all": w_all.astype(jnp.bfloat16),
            "b_all": b_all.astype(jnp.float32),
            "wz": wz.astype(jnp.bfloat16),
            "w_feats": w_feats.astype(jnp.bfloat16),
            "bias_b": bias_b[:, None].astype(jnp.float32),
            "sizes": sizes, "ncp": ncp, "thw": thw, "hw_pad": hw_pad,
            "vmem_limit": vmem_limit}


# ----------------------------------------------------------------------------
# JAX glue
# ----------------------------------------------------------------------------
def _upsample_bilinear_nchw(x, H, W):
    """F.upsample(mode='bilinear', align_corners=True) for NCHW input (reference)."""
    N, C, s, _ = x.shape
    if s == 1:
        return jnp.broadcast_to(x, (N, C, H, W))
    ys = jnp.arange(H, dtype=jnp.float32) * (s - 1) / max(H - 1, 1)
    xs = jnp.arange(W, dtype=jnp.float32) * (s - 1) / max(W - 1, 1)
    y0 = jnp.clip(jnp.floor(ys).astype(jnp.int32), 0, s - 2)
    x0 = jnp.clip(jnp.floor(xs).astype(jnp.int32), 0, s - 2)
    wy = (ys - y0.astype(jnp.float32))[None, None, :, None]
    wx = (xs - x0.astype(jnp.float32))[None, None, None, :]
    g = lambda yi, xi: x[:, :, yi][:, :, :, xi]
    top = g(y0, x0) * (1.0 - wx) + g(y0, x0 + 1) * wx
    bot = g(y0 + 1, x0) * (1.0 - wx) + g(y0 + 1, x0 + 1) * wx
    return top * (1.0 - wy) + bot * wy


def psp_module_forward(feats_nchw, packed):
    """PSPModule.forward — NCHW in, NCHW out, no layout transposes."""
    N, C, H, W = feats_nchw.shape
    F = packed["w_feats"].shape[0]
    hw, hw_pad = H * W, packed["hw_pad"]

    feats_cf = feats_nchw.reshape(N, C, hw).astype(jnp.bfloat16)   # free reshape
    if hw_pad != hw:
        feats_cf = jnp.pad(feats_cf, ((0, 0), (0, 0), (0, hw_pad - hw)))

    # 1) fused adaptive-pool + 4x(conv+BN+ReLU) + bottleneck stage slices [Pallas]
    z = _fused_stage_call(feats_cf, packed)
    # 2) fused identity-branch matmul + upsample-as-matmul + bias + ReLU [Pallas]
    out = _bottleneck_call(feats_cf, z, packed)
    # Outer self.relu() in PSPModule.forward is idempotent after the fused ReLU.
    return out[:, :, :hw].reshape(N, F, H, W)


def psp_module_forward_ref(feats_nchw, params):
    """Pure-jnp f32 reference: direct translation of PSPModule.forward.
    (Pools via reshape-mean, so requires H, W divisible by every pyramid size.)"""
    eps, sizes = params["eps"], params["sizes"]
    N, C, H, W = feats_nchw.shape
    x = feats_nchw.astype(jnp.float32)

    def bn(v, b):
        scale = b["gamma"] / jnp.sqrt(b["var"] + eps)
        bias = b["beta"] - b["mean"] * scale
        return v * scale[None, :, None, None] + bias[None, :, None, None]

    priors = []
    for st, s in zip(params["stages"], sizes):
        kh, kw = H // s, W // s
        pooled = x.reshape(N, C, s, kh, s, kw).mean(axis=(3, 5))
        y = jnp.einsum('oc,ncij->noij', st["w"], pooled)
        y = jnp.maximum(bn(y, st["bn"]), 0.0)
        priors.append(_upsample_bilinear_nchw(y, H, W))
    priors.append(x)
    cat = jnp.concatenate(priors, axis=1)
    y = jnp.einsum('oc,ncij->noij', params["wb"], cat)
    return jnp.maximum(bn(y, params["bnb"]), 0.0)


if __name__ == "__main__":
    # TODO(synk): build_backbone / CoarseNet / FineNet are undefined in the
    # reference source, and iou_cal / generate_distance_map / getPositon are
    # host-side numpy+scipy (distance_transform_edt, data-dependent control
    # flow) with no Pallas equivalent; only the fully-defined PSP head (psp4)
    # of SegmentationNetwork.forward is implemented here.
    key = jax.random.PRNGKey(0)
    N, C, H, W = 2, 256, 12, 12          # scaled-down stand-in for low_level_feat_4
    out_features = 64
    sizes = SIZES

    kp, kx = jax.random.split(key)
    params = init_psp_params(kp, C, out_features, sizes)
    packed = pack_psp_params(params, H, W)
    feats = jax.random.normal(kx, (N, C, H, W), dtype=jnp.float32)

    out = jax.block_until_ready(psp_module_forward(feats, packed))
    assert out.shape == (N, out_features, H, W), out.shape

    ref = psp_module_forward_ref(feats, params)
    max_err = float(jnp.max(jnp.abs(out - ref)))
    assert max_err < 5e-2, f"mismatch vs reference: {max_err}"

    print("KERNEL_OK")
</pallas_src>

<mosaic_0001>
module attributes {stable_mosaic.version = 11 : i64} {
  func.func @_stage_kernel(%arg0: i32, %arg1: i32, %arg2: memref<1x256x256xbf16, #tpu.memory_space<vmem>>, %arg3: memref<256x128xbf16, #tpu.memory_space<vmem>>, %arg4: memref<256x256xbf16, #tpu.memory_space<vmem>>, %arg5: memref<256x1xf32, #tpu.memory_space<vmem>>, %arg6: memref<256x128xbf16, #tpu.memory_space<vmem>>, %arg7: memref<64x256xbf16, #tpu.memory_space<vmem>>, %arg8: memref<1x64x128xbf16, #tpu.memory_space<vmem>>, %arg9: memref<256x128xf32, #tpu.memory_space<vmem>>) attributes {dimension_semantics = [#tpu.dimension_semantics<parallel>, #tpu.dimension_semantics<arbitrary>], iteration_bounds = array<i64: 2, 1>, scalar_prefetch = 0 : i64, scratch_operands = 1 : i64, tpu.core_type = #tpu.core_type<tc>, window_params = [{transform_indices = @transform_0, window_bounds = array<i64: 1, 256, 256>}, {transform_indices = @transform_1, window_bounds = array<i64: 256, 128>}, {pipeline_mode = #tpu.pipeline_mode<synchronous>, transform_indices = @transform_2, window_bounds = array<i64: 256, 256>}, {pipeline_mode = #tpu.pipeline_mode<synchronous>, transform_indices = @transform_3, window_bounds = array<i64: 256, 1>}, {pipeline_mode = #tpu.pipeline_mode<synchronous>, transform_indices = @transform_4, window_bounds = array<i64: 256, 128>}, {pipeline_mode = #tpu.pipeline_mode<synchronous>, transform_indices = @transform_5, window_bounds = array<i64: 64, 256>}, {transform_indices = @transform_6, window_bounds = array<i64: 1, 64, 128>}]} {
    %c0_i32 = arith.constant 0 : i32
    %0 = arith.cmpi eq, %arg1, %c0_i32 : i32
    %1 = arith.extui %0 : i1 to i32
    %c0_i32_0 = arith.constant 0 : i32
    %2 = arith.cmpi ne, %1, %c0_i32_0 : i32
    scf.if %2 {
      %cst_11 = arith.constant 0.000000e+00 : f32
      %13 = vector.broadcast %cst_11 : f32 to vector<256x128xf32>
      %c0_12 = arith.constant 0 : index
      %c0_13 = arith.constant 0 : index
      %14 = vector.load %arg9[%c0_12, %c0_13] : memref<256x128xf32, #tpu.memory_space<vmem>>, vector<256x128xf32>
      tpu.vector_store %arg9[%c0_12, %c0_13], %13 {strides = array<i32>} : memref<256x128xf32, #tpu.memory_space<vmem>>, vector<256x128xf32>,
    } else {
    }
    %c0 = arith.constant 0 : index
    %c0_1 = arith.constant 0 : index
    %3 = vector.load %arg9[%c0, %c0_1] : memref<256x128xf32, #tpu.memory_space<vmem>>, vector<256x128xf32>
    %c0_2 = arith.constant 0 : index
    %c0_3 = arith.constant 0 : index
    %c0_4 = arith.constant 0 : index
    %4 = vector.load %arg2[%c0_2, %c0_3, %c0_4] : memref<1x256x256xbf16, #tpu.memory_space<vmem>>, vector<1x256x256xbf16>
    %5 = vector.shape_cast %4 : vector<1x256x256xbf16> to vector<256x256xbf16>
    %c0_5 = arith.constant 0 : index
    %c0_6 = arith.constant 0 : index
    %6 = vector.load %arg3[%c0_5, %c0_6] : memref<256x128xbf16, #tpu.memory_space<vmem>>, vector<256x128xbf16>
    %cst = arith.constant dense<0.000000e+00> : vector<256x128xf32>
    %7 = tpu.matmul %5, %6, %cst {dimension_numbers = #tpu.dot_dimension_numbers<[1], [0], [0], [1], [0, 0, 1, 1], [], []>} : vector<256x256xbf16>, vector<256x128xbf16>, vector<256x128xf32> -> vector<256x128xf32>
    %8 = arith.addf %3, %7 : vector<256x128xf32>
    %c0_7 = arith.constant 0 : index
    %c0_8 = arith.constant 0 : index
    %9 = vector.load %arg9[%c0_7, %c0_8] : memref<256x128xf32, #tpu.memory_space<vmem>>, vector<256x128xf32>
    tpu.vector_store %arg9[%c0_7, %c0_8], %8 {strides = array<i32>} : memref<256x128xf32, #tpu.memory_space<vmem>>, vector<256x128xf32>,
    %c0_i32_9 = arith.constant 0 : i32
    %10 = arith.cmpi eq, %arg1, %c0_i32_9 : i32
    %11 = arith.extui %10 : i1 to i32
    %c0_i32_10 = arith.constant 0 : i32
    %12 = arith.cmpi ne, %11, %c0_i32_10 : i32
    scf.if %12 {
      %c0_11 = arith.constant 0 : index
      %c0_12 = arith.constant 0 : index
      %13 = vector.load %arg9[%c0_11, %c0_12] : memref<256x128xf32, #tpu.memory_space<vmem>>, vector<256x128xf32>
      %14 = arith.truncf %13 : vector<256x128xf32> to vector<256x128xbf16>
      %c0_13 = arith.constant 0 : index
      %c0_14 = arith.constant 0 : index
      %15 = vector.load %arg4[%c0_13, %c0_14] : memref<256x256xbf16, #tpu.memory_space<vmem>>, vector<256x256xbf16>
      %cst_15 = arith.constant dense<0.000000e+00> : vector<256x128xf32>
      %16 = tpu.matmul %15, %14, %cst_15 {dimension_numbers = #tpu.dot_dimension_numbers<[1], [0], [0], [1], [0, 0, 1, 1], [], []>} : vector<256x256xbf16>, vector<256x128xbf16>, vector<256x128xf32> -> vector<256x128xf32>
      %c0_16 = arith.constant 0 : index
      %c0_17 = arith.constant 0 : index
      %17 = vector.load %arg5[%c0_16, %c0_17] : memref<256x1xf32, #tpu.memory_space<vmem>>, vector<256x1xf32>
      %18 = vector.broadcast %17 : vector<256x1xf32> to vector<256x128xf32>
      %19 = arith.addf %16, %18 : vector<256x128xf32>
      %cst_18 = arith.constant 0.000000e+00 : f32
      %20 = vector.broadcast %cst_18 : f32 to vector<256x128xf32>
      %21 = arith.maximumf %19, %20 : vector<256x128xf32>
      %c0_19 = arith.constant 0 : index
      %c0_20 = arith.constant 0 : index
      %22 = vector.load %arg6[%c0_19, %c0_20] : memref<256x128xbf16, #tpu.memory_space<vmem>>, vector<256x128xbf16>
      %23 = arith.extf %22 : vector<256x128xbf16> to vector<256x128xf32>
      %24 = arith.mulf %21, %23 : vector<256x128xf32>
      %25 = arith.truncf %24 : vector<256x128xf32> to vector<256x128xbf16>
      %c0_21 = arith.constant 0 : index
      %c0_22 = arith.constant 0 : index
      %26 = vector.load %arg7[%c0_21, %c0_22] : memref<64x256xbf16, #tpu.memory_space<vmem>>, vector<64x256xbf16>
      %cst_23 = arith.constant dense<0.000000e+00> : vector<64x128xf32>
      %27 = tpu.matmul %26, %25, %cst_23 {dimension_numbers = #tpu.dot_dimension_numbers<[1], [0], [0], [1], [0, 0, 1, 1], [], []>} : vector<64x256xbf16>, vector<256x128xbf16>, vector<64x128xf32> -> vector<64x128xf32>
      %28 = arith.truncf %27 : vector<64x128xf32> to vector<64x128xbf16>
      %c0_24 = arith.constant 0 : index
      %c0_25 = arith.constant 0 : index
      %c0_26 = arith.constant 0 : index
      %29 = vector.load %arg8[%c0_24, %c0_25, %c0_26] : memref<1x64x128xbf16, #tpu.memory_space<vmem>>, vector<1x64x128xbf16>
      %30 = vector.shape_cast %29 : vector<1x64x128xbf16> to vector<64x128xbf16>
      %31 = vector.shape_cast %28 : vector<64x128xbf16> to vector<1x64x128xbf16>
      tpu.vector_store %arg8[%c0_24, %c0_25, %c0_26], %31 {strides = array<i32>} : memref<1x64x128xbf16, #tpu.memory_space<vmem>>, vector<1x64x128xbf16>,
    } else {
    }
    return
  }
  func.func @transform_0(%arg0: i32, %arg1: i32) -> (i32, i32, i32) {
    %c0_i32 = arith.constant 0 : i32
    %c0_i32_0 = arith.constant 0 : i32
    return %arg0, %c0_i32, %arg1 : i32, i32, i32
  }
  func.func @transform_1(%arg0: i32, %arg1: i32) -> (i32, i32) {
    %c0_i32 = arith.constant 0 : i32
    %c0_i32_0 = arith.constant 0 : i32
    return %arg1, %c0_i32 : i32, i32
  }
  func.func @transform_2(%arg0: i32, %arg1: i32) -> (i32, i32) {
    %c0_i32 = arith.constant 0 : i32
    %c0_i32_0 = arith.constant 0 : i32
    %c0_i32_1 = arith.constant 0 : i32
    return %c0_i32, %c0_i32_0 : i32, i32
  }
  func.func @transform_3(%arg0: i32, %arg1: i32) -> (i32, i32) {
    %c0_i32 = arith.constant 0 : i32
    %c0_i32_0 = arith.constant 0 : i32
    %c0_i32_1 = arith.constant 0 : i32
    return %c0_i32, %c0_i32_0 : i32, i32
  }
  func.func @transform_4(%arg0: i32, %arg1: i32) -> (i32, i32) {
    %c0_i32 = arith.constant 0 : i32
    %c0_i32_0 = arith.constant 0 : i32
    %c0_i32_1 = arith.constant 0 : i32
    return %c0_i32, %c0_i32_0 : i32, i32
  }
  func.func @transform_5(%arg0: i32, %arg1: i32) -> (i32, i32) {
    %c0_i32 = arith.constant 0 : i32
    %c0_i32_0 = arith.constant 0 : i32
    %c0_i32_1 = arith.constant 0 : i32
    return %c0_i32, %c0_i32_0 : i32, i32
  }
  func.func @transform_6(%arg0: i32, %arg1: i32) -> (i32, i32, i32) {
    %c0_i32 = arith.constant 0 : i32
    %c0_i32_0 = arith.constant 0 : i32
    %c0_i32_1 = arith.constant 0 : i32
    return %arg0, %c0_i32, %c0_i32_0 : i32, i32, i32
  }
}

</mosaic_0001>

<llo_original>
// kernel: tpu_custom_call.1
$region0: #{tpu_custom_call.1}
  #allocation0 [shape = 'u32[]', space=smem, size = 0x4, offset = 0x4, fixed_abs, tag = 'smem constant byte address 0x4 - core index']
  #allocation1 [shape = 'u32[144,128]{1,0:T(1,128)}', space=vmem, size = 0x12000, scoped, tag = 'internal scratch']
  #allocation2 [shape = 'f32[256,128]{1,0:T(8,128)}', space=vmem, size = 0x20000, scoped, tag = 'scratch operand']
  %s0 = inlined_call_operand.hbm [shape: bf16[2,256,256], index: 0, kind: input, shape index: {}]
  %s1 = inlined_call_operand.hbm [shape: bf16[256,128], index: 1, kind: input, shape index: {}]
  %s2 = inlined_call_operand.vmem [shape: bf16[256,256], index: 2, kind: input, shape index: {}]
  %s3 = inlined_call_operand.vmem [shape: f32[256,1], index: 3, kind: input, shape index: {}]
  %s4 = inlined_call_operand.hbm [shape: bf16[256,128], index: 4, kind: input, shape index: {}]
  %s5 = inlined_call_operand.hbm [shape: bf16[64,256], index: 5, kind: input, shape index: {}]
  %s6 = inlined_call_operand.hbm [shape: bf16[2,64,128], index: 6, kind: output, shape index: {}]
  %s7 = sld [smem:[#allocation0]]
  $region81: #{tpu_custom_call.1} parent=0
    _
  %s9 = ssub.s32 1, %s7
  %s10 = scalar_select 0, %s9, %s7
  $region1: #{tpu_custom_call.1} parent=0
    #allocation3 [shape = 'u8[262144]{0}', space=vmem, size = 0x40000, scoped, tag = 'input window, operand 0']
    #allocation4 [shape = 's32[2]{0}', space=sflag, size = 0x8, scoped, tag = 'scoped memory for tpu_custom_call.1']
    #allocation5 [shape = 's32[2]{0}', space=sflag, size = 0x8, scoped, tag = 'scoped memory for tpu_custom_call.1']
    #allocation6 [shape = 'u8[65536]{0}', space=vmem, size = 0x10000, scoped, tag = 'input window, operand 1, single buffered']
    #allocation7 [shape = 's32[1]{0}', space=sflag, size = 0x4, scoped, tag = 'scoped memory for tpu_custom_call.1']
    #allocation8 [shape = 'u8[65536]{0}', space=vmem, size = 0x10000, scoped, tag = 'input window, operand 4, single buffered']
    #allocation9 [shape = 'u8[32768]{0}', space=vmem, size = 0x8000, scoped, tag = 'input window, operand 5, single buffered']
    #allocation10 [shape = 's32[1]{0}', space=sflag, size = 0x4, scoped, tag = 'scoped memory for tpu_custom_call.1']
    #allocation11 [shape = 'u8[32768]{0}', space=vmem, size = 0x8000, scoped, tag = 'output window, operand 0']
    %11 = vsyncpa [#allocation4], 0
    %s12 = scalar_lea.sflag [#allocation4], 1
    %13 = vsyncpa %s12, 0
    %14 = vsyncpa [#allocation7], 0
    %15 = vsyncpa [#allocation10], 0
    %16 = vsyncpa [#allocation5], 0
    %s17 = scalar_lea.sflag [#allocation5], 1
    %18 = vsyncpa %s17, 0
    loop: start=0, step=1, limit=4
    $region2: #{tpu_custom_call.1} parent=1 // loop_pre_header
      _
    $region3: #{tpu_custom_call.1} parent=1 // loop_header
      %s20 = sphi 0, %s24
      %p21 = scmp.ge.s32.totalorder %s20, 4
      %s27 = sphi 0, %s39
      %s28 = sphi 0, %s35
      %s29 = sphi 0, %s27
      %s30 = sphi 0, %s28
      %s31 = sphi 0, %s29
      %s32 = sphi 0, %s30
      %s44 = sphi 0, %s46
      %s47 = sphi 0, %s44
      %s48 = sphi 0, %s47
      %s64 = sphi 0, %s48
      %s70 = sphi 0, %s72
      %s73 = sphi 0, %s70
      %s74 = sphi 0, %s73
      %s90 = sphi 0, %s74
      %s94 = sphi 0, %s94
      %s96 = sphi 0, %s94
      %s97 = sphi 0, %s96
      %s111 = sphi 0, %s97
      %s115 = sphi 0, %s115
      %s117 = sphi 0, %s115
      %s118 = sphi 0, %s117
      %s132 = sphi 0, %s118
      %s136 = sphi 0, %s136
      %s138 = sphi 0, %s136
      %s139 = sphi 0, %s138
      %s153 = sphi 0, %s139
      %s157 = sphi 0, %s157
      %s159 = sphi 0, %s157
      %s160 = sphi 0, %s159
      %s174 = sphi 0, %s160
      %s180 = sphi 0, %s182
      %s183 = sphi 0, %s180
      %s184 = sphi 0, %s183
      %s200 = sphi 0, %s184
    $region4: #{tpu_custom_call.1} parent=1 // loop_header_branch
      %23 = sbr.rel (%p21) target = $region8
    $region5: #{tpu_custom_call.1} parent=1 // loop_body
      %s25 = ssub.s32 %s20, 1
      %s26 = ssub.s32 %s20, 2
      %s33 = sadd.s32 1, %s28
      %p34 = scmp.ge.s32.totalorder %s33, 1
      %s35 = scalar_select %p34, 0, %s33
      %s36 = sadd.s32 1, %s27
      %s37 = scalar_select %p34, %s36, %s27
      %p38 = scmp.ge.s32.totalorder %s37, 2
      %s39 = scalar_select %p38, 0, %s37
      %s40 = ssub.s32 %s27, %s39
      %s41 = ssub.s32 %s28, %s35
      %s42 = sor.u32 %s40, %s41
      %p43 = scmp.eq.s32.totalorder %s42, 0
      %s45 = sadd.s32 %s44, 1
      %s46 = scalar_select %p43, %s44, %s45
      %p49 = pneg %p43
      %p50 = scmp.eq.s32.totalorder %s20, 1
      %p51 = por %p49, %p50
      %p52 = scmp.ne.s32.totalorder %s44, %s47
      %p53 = scmp.eq.s32.totalorder %s20, 0
      %p54 = por %p52, %p53
      %p55 = scmp.ne.s32.totalorder %s44, %s47
      %p56 = scmp.eq.s32.totalorder %s25, 1
      %p57 = por %p55, %p56
      %p58 = scmp.ne.s32.totalorder %s47, %s48
      %p59 = scmp.eq.s32.totalorder %s25, 0
      %p60 = por %p58, %p59
      %p61 = scmp.ne.s32.totalorder %s47, %s48
      %p62 = scmp.eq.s32.totalorder %s26, 1
      %p63 = por %p61, %p62
      %p65 = scmp.ne.s32.totalorder %s48, %s64
      %p66 = scmp.eq.s32.totalorder %s26, 0
      %p67 = por %p65, %p66
      %s68 = ssub.s32 %s28, %s35
      %p69 = scmp.eq.s32.totalorder %s68, 0
      %s71 = sadd.s32 %s70, 1
      %s72 = scalar_select %p69, %s70, %s71
      %p75 = pneg %p69
      %p76 = scmp.eq.s32.totalorder %s20, 1
      %p77 = por %p75, %p76
      %p78 = scmp.ne.s32.totalorder %s70, %s73
      %p79 = scmp.eq.s32.totalorder %s20, 0
      %p80 = por %p78, %p79
      %p81 = scmp.ne.s32.totalorder %s70, %s73
      %p82 = scmp.eq.s32.totalorder %s25, 1
      %p83 = por %p81, %p82
      %p84 = scmp.ne.s32.totalorder %s73, %s74
      %p85 = scmp.eq.s32.totalorder %s25, 0
      %p86 = por %p84, %p85
      %p87 = scmp.ne.s32.totalorder %s73, %s74
      %p88 = scmp.eq.s32.totalorder %s26, 1
      %p89 = por %p87, %p88
      %p91 = scmp.ne.s32.totalorder %s74, %s90
      %p92 = scmp.eq.s32.totalorder %s26, 0
      %p93 = por %p91, %p92
      %s95 = sadd.s32 %s94, 1
      %p98 = scmp.eq.s32.totalorder %s20, 1
      %p99 = scmp.ne.s32.totalorder %s94, %s96
      %p100 = scmp.eq.s32.totalorder %s20, 0
      %p101 = por %p99, %p100
      %p102 = scmp.ne.s32.totalorder %s94, %s96
      %p103 = scmp.eq.s32.totalorder %s25, 1
      %p104 = por %p102, %p103
      %p105 = scmp.ne.s32.totalorder %s96, %s97
      %p106 = scmp.eq.s32.totalorder %s25, 0
      %p107 = por %p105, %p106
      %p108 = scmp.ne.s32.totalorder %s96, %s97
      %p109 = scmp.eq.s32.totalorder %s26, 1
      %p110 = por %p108, %p109
      %p112 = scmp.ne.s32.totalorder %s97, %s111
      %p113 = scmp.eq.s32.totalorder %s26, 0
      %p114 = por %p112, %p113
      %s116 = sadd.s32 %s115, 1
      %p119 = scmp.eq.s32.totalorder %s20, 1
      %p120 = scmp.ne.s32.totalorder %s115, %s117
      %p121 = scmp.eq.s32.totalorder %s20, 0
      %p122 = por %p120, %p121
      %p123 = scmp.ne.s32.totalorder %s115, %s117
      %p124 = scmp.eq.s32.totalorder %s25, 1
      %p125 = por %p123, %p124
      %p126 = scmp.ne.s32.totalorder %s117, %s118
      %p127 = scmp.eq.s32.totalorder %s25, 0
      %p128 = por %p126, %p127
      %p129 = scmp.ne.s32.totalorder %s117, %s118
      %p130 = scmp.eq.s32.totalorder %s26, 1
      %p131 = por %p129, %p130
      %p133 = scmp.ne.s32.totalorder %s118, %s132
      %p134 = scmp.eq.s32.totalorder %s26, 0
      %p135 = por %p133, %p134
      %s137 = sadd.s32 %s136, 1
      %p140 = scmp.eq.s32.totalorder %s20, 1
      %p141 = scmp.ne.s32.totalorder %s136, %s138
      %p142 = scmp.eq.s32.totalorder %s20, 0
      %p143 = por %p141, %p142
      %p144 = scmp.ne.s32.totalorder %s136, %s138
      %p145 = scmp.eq.s32.totalorder %s25, 1
      %p146 = por %p144, %p145
      %p147 = scmp.ne.s32.totalorder %s138, %s139
      %p148 = scmp.eq.s32.totalorder %s25, 0
      %p149 = por %p147, %p148
      %p150 = scmp.ne.s32.totalorder %s138, %s139
      %p151 = scmp.eq.s32.totalorder %s26, 1
      %p152 = por %p150, %p151
      %p154 = scmp.ne.s32.totalorder %s139, %s153
      %p155 = scmp.eq.s32.totalorder %s26, 0
      %p156 = por %p154, %p155
      %s158 = sadd.s32 %s157, 1
      %p161 = scmp.eq.s32.totalorder %s20, 1
      %p162 = scmp.ne.s32.totalorder %s157, %s159
      %p163 = scmp.eq.s32.totalorder %s20, 0
      %p164 = por %p162, %p163
      %p165 = scmp.ne.s32.totalorder %s157, %s159
      %p166 = scmp.eq.s32.totalorder %s25, 1
      %p167 = por %p165, %p166
      %p168 = scmp.ne.s32.totalorder %s159, %s160
      %p169 = scmp.eq.s32.totalorder %s25, 0
      %p170 = por %p168, %p169
      %p171 = scmp.ne.s32.totalorder %s159, %s160
      %p172 = scmp.eq.s32.totalorder %s26, 1
      %p173 = por %p171, %p172
      %p175 = scmp.ne.s32.totalorder %s160, %s174
      %p176 = scmp.eq.s32.totalorder %s26, 0
      %p177 = por %p175, %p176
      %s178 = ssub.s32 %s27, %s39
      %p179 = scmp.eq.s32.totalorder %s178, 0
      %s181 = sadd.s32 %s180, 1
      %s182 = scalar_select %p179, %s180, %s181
      %p185 = pneg %p179
      %p186 = scmp.eq.s32.totalorder %s20, 1
      %p187 = por %p185, %p186
      %p188 = scmp.ne.s32.totalorder %s180, %s183
      %p189 = scmp.eq.s32.totalorder %s20, 0
      %p190 = por %p188, %p189
      %p191 = scmp.ne.s32.totalorder %s180, %s183
      %p192 = scmp.eq.s32.totalorder %s25, 1
      %p193 = por %p191, %p192
      %p194 = scmp.ne.s32.totalorder %s183, %s184
      %p195 = scmp.eq.s32.totalorder %s25, 0
      %p196 = por %p194, %p195
      %p197 = scmp.ne.s32.totalorder %s183, %s184
      %p198 = scmp.eq.s32.totalorder %s26, 1
      %p199 = por %p197, %p198
      %p201 = scmp.ne.s32.totalorder %s184, %s200
      %p202 = scmp.eq.s32.totalorder %s26, 0
      %p203 = por %p201, %p202
      %p204 = scmp.le.s32.totalorder 1, %s20
      %p205 = scmp.lt.s32.totalorder %s20, 3
      %p206 = pnand %p204, %p205
      %p207 = pneg %p206
      // Predicated region
      $region9: #{tpu_custom_call.1} parent=5 // pred_check
        _
      $region10: #{tpu_custom_call.1} parent=5 // pred_check_branch
        %209 = sbr.rel (%p206) target = $region12
      $region11: #{tpu_custom_call.1} parent=5 // pred_region
        %s210 = ssub.s32 %s20, 1
        // Predicated region
        $region13: #{tpu_custom_call.1} parent=11 // pred_check
          %p211 = pneg %p86
        $region14: #{tpu_custom_call.1} parent=11 // pred_check_branch
          %213 = sbr.rel (%p211) target = $region16
        $region15: #{tpu_custom_call.1} parent=11 // pred_region
          %s214 = smul.u32 32, %s30
          %s216 = ssub.s32 2048, 2048
          %217 = vsyncadd [#allocation7], %s216
          %s218 = smul.addr %s214, 64
          %s219 = scalar_lea.hbm %s1, %s218
          %s220 = sshll.u32 [#allocation6], 4
          %s221 = int_to_ptr.vmem [resolvable:$true] %s220
          %226 = dma.hbm_to_vmem [thread:$0]  %s219, 2048, %s221, [#allocation7], 64, 64, 4
        $region16: #{tpu_custom_call.1} parent=11 // pred_fallthru
          _
        // Predicated region
        $region17: #{tpu_custom_call.1} parent=11 // pred_check
          %p227 = pneg %p107
        $region18: #{tpu_custom_call.1} parent=11 // pred_check_branch
          %229 = sbr.rel (%p227) target = $region20
        $region19: #{tpu_custom_call.1} parent=11 // pred_region
          _
        $region20: #{tpu_custom_call.1} parent=11 // pred_fallthru
          _
        // Predicated region
        $region21: #{tpu_custom_call.1} parent=11 // pred_check
          %p230 = pneg %p128
        $region22: #{tpu_custom_call.1} parent=11 // pred_check_branch
          %232 = sbr.rel (%p230) target = $region24
        $region23: #{tpu_custom_call.1} parent=11 // pred_region
          _
        $region24: #{tpu_custom_call.1} parent=11 // pred_fallthru
          _
        // Predicated region
        $region25: #{tpu_custom_call.1} parent=11 // pred_check
          %p233 = pneg %p149
        $region26: #{tpu_custom_call.1} parent=11 // pred_check_branch
          %235 = sbr.rel (%p233) target = $region28
        $region27: #{tpu_custom_call.1} parent=11 // pred_region
          %s237 = ssub.s32 2048, 2048
          %238 = vsyncadd [#allocation7], %s237
          %s239 = sshll.u32 [#allocation8], 4
          %s240 = int_to_ptr.vmem [resolvable:$true] %s239
          %245 = dma.hbm_to_vmem [thread:$0]  %s4, 2048, %s240, [#allocation7], 64, 64, 4
        $region28: #{tpu_custom_call.1} parent=11 // pred_fallthru
          _
        // Predicated region
        $region29: #{tpu_custom_call.1} parent=11 // pred_check
          %p246 = pneg %p170
        $region30: #{tpu_custom_call.1} parent=11 // pred_check_branch
          %248 = sbr.rel (%p246) target = $region32
        $region31: #{tpu_custom_call.1} parent=11 // pred_region
          %s250 = ssub.s32 1024, 1024
          %251 = vsyncadd [#allocation10], %s250
          %s252 = sshll.u32 [#allocation9], 4
          %s253 = int_to_ptr.vmem [resolvable:$true] %s252
          %258 = dma.hbm_to_vmem [thread:$0]  %s5, 1024, %s253, [#allocation10], 128, 128, 8
        $region32: #{tpu_custom_call.1} parent=11 // pred_fallthru
          _
      $region12: #{tpu_custom_call.1} parent=5 // pred_fallthru
        _
      %p259 = scmp.lt.s32.totalorder %s20, 2
      // Predicated region
      $region33: #{tpu_custom_call.1} parent=5 // pred_check
        %p260 = pneg %p259
      $region34: #{tpu_custom_call.1} parent=5 // pred_check_branch
        %262 = sbr.rel (%p260) target = $region36
      $region35: #{tpu_custom_call.1} parent=5 // pred_region
        // Predicated region
        $region37: #{tpu_custom_call.1} parent=35 // pred_check
          %p263 = pneg %p54
        $region38: #{tpu_custom_call.1} parent=35 // pred_check_branch
          %265 = sbr.rel (%p263) target = $region40
        $region39: #{tpu_custom_call.1} parent=35 // pred_region
          %s266 = sand.u32 %s44, 1
          %s267 = scalar_lea.sflag [#allocation4], %s266
          %s268 = sand.u32 %s44, 1
          %s269 = smul.addr %s268, 256
          %s270 = scalar_lea.vmem [#allocation3], %s269
          %s271 = smul.u32 2, %s28
          %s273 = ssub.s32 4096, 4096
          %274 = vsyncadd %s267, %s273
          %s275 = smul.addr %s27, 64
          %s276 = sadd.s32 %s271, %s275
          %s277 = smul.addr %s276, 64
          %s278 = scalar_lea.hbm %s0, %s277
          %s279 = sshll.u32 %s270, 4
          %s280 = int_to_ptr.vmem [resolvable:$true] %s279
          %285 = dma.hbm_to_vmem [thread:$0]  %s278, 4096, %s280, %s267, 128, 128, 8
        $region40: #{tpu_custom_call.1} parent=35 // pred_fallthru
          _
      $region36: #{tpu_custom_call.1} parent=5 // pred_fallthru
        _
      %p286 = scmp.le.s32.totalorder 1, %s20
      %p287 = scmp.lt.s32.totalorder %s20, 3
      %p288 = pnand %p286, %p287
      %p289 = pneg %p288
      // Predicated region
      $region41: #{tpu_custom_call.1} parent=5 // pred_check
        _
      $region42: #{tpu_custom_call.1} parent=5 // pred_check_branch
        %291 = sbr.rel (%p288) target = $region44
      $region43: #{tpu_custom_call.1} parent=5 // pred_region
        %s292 = ssub.s32 %s20, 1
        %s293 = sand.u32 %s47, 1
        %s294 = scalar_lea.sflag [#allocation4], %s293
        %s295 = sand.u32 %s47, 1
        %s296 = smul.addr %s295, 256
        %s297 = scalar_lea.vmem [#allocation3], %s296
        // Predicated region
        $region45: #{tpu_custom_call.1} parent=43 // pred_check
          %p298 = pneg %p60
        $region46: #{tpu_custom_call.1} parent=43 // pred_check_branch
          %300 = sbr.rel (%p298) target = $region48
        $region47: #{tpu_custom_call.1} parent=43 // pred_region
          %301 = dma.done %s294, 4096
        $region48: #{tpu_custom_call.1} parent=43 // pred_fallthru
          _
        // Predicated region
        $region49: #{tpu_custom_call.1} parent=43 // pred_check
          %p302 = pneg %p86
        $region50: #{tpu_custom_call.1} parent=43 // pred_check_branch
          %304 = sbr.rel (%p302) target = $region52
        $region51: #{tpu_custom_call.1} parent=43 // pred_region
          %305 = dma.done [#allocation7], 2048
        $region52: #{tpu_custom_call.1} parent=43 // pred_fallthru
          _
        // Predicated region
        $region53: #{tpu_custom_call.1} parent=43 // pred_check
          %p306 = pneg %p149
        $region54: #{tpu_custom_call.1} parent=43 // pred_check_branch
          %308 = sbr.rel (%p306) target = $region56
        $region55: #{tpu_custom_call.1} parent=43 // pred_region
          %309 = dma.done [#allocation7], 2048
        $region56: #{tpu_custom_call.1} parent=43 // pred_fallthru
          _
        // Predicated region
        $region57: #{tpu_custom_call.1} parent=43 // pred_check
          %p310 = pneg %p170
        $region58: #{tpu_custom_call.1} parent=43 // pred_check_branch
          %312 = sbr.rel (%p310) target = $region60
        $region59: #{tpu_custom_call.1} parent=43 // pred_region
          %313 = dma.done [#allocation10], 1024
        $region60: #{tpu_custom_call.1} parent=43 // pred_fallthru
          _
        %s314 = sand.u32 %s47, 1
        %s315 = scalar_lea.sflag [#allocation4], %s314
        %s316 = sand.u32 %s47, 1
        %s317 = smul.addr %s316, 256
        %s318 = scalar_lea.vmem [#allocation3], %s317
        %p319 = pneg %p60
        %p320 = pneg %p57
        %p321 = pneg %p86
        %p322 = pneg %p83
        %p323 = pneg %p107
        %p324 = pneg %p104
        %p325 = pneg %p128
        %p326 = pneg %p125
        %p327 = pneg %p149
        %p328 = pneg %p146
        %p329 = pneg %p170
        %p330 = pneg %p167
        %p331 = pneg %p196
        %p332 = pneg %p193
        %s333 = sand.u32 %s183, 1
        %s334 = scalar_lea.sflag [#allocation5], %s333
        %s335 = sand.u32 %s183, 1
        %s336 = smul.addr %s335, 32
        %s337 = scalar_lea.vmem [#allocation11], %s336
        %s338 = smul.u32 2, %s30
        %s339 = smul.u32 32, %s30
        %p341 = scmp.eq.s32.totalorder %s30, 0
        // Predicated region
        $region61: #{tpu_custom_call.1} parent=43 // pred_check
          %p342 = pneg %p341
        $region62: #{tpu_custom_call.1} parent=43 // pred_check_branch
          %344 = sbr.rel (%p342) target = $region64
        $region63: #{tpu_custom_call.1} parent=43 // pred_region
          %345 = vst [vmem:[#allocation2] sm:$0xff] 0.0
          %346 = vst [vmem:[#allocation2 + $0x8] sm:$0xff] 0.0
          %347 = vst [vmem:[#allocation2 + $0x10] sm:$0xff] 0.0
          %348 = vst [vmem:[#allocation2 + $0x18] sm:$0xff] 0.0
          %349 = vst [vmem:[#allocation2 + $0x20] sm:$0xff] 0.0
          %350 = vst [vmem:[#allocation2 + $0x28] sm:$0xff] 0.0
          %351 = vst [vmem:[#allocation2 + $0x30] sm:$0xff] 0.0
          %352 = vst [vmem:[#allocation2 + $0x38] sm:$0xff] 0.0
          %353 = vst [vmem:[#allocation2 + $0x40] sm:$0xff] 0.0
          %354 = vst [vmem:[#allocation2 + $0x48] sm:$0xff] 0.0
          %355 = vst [vmem:[#allocation2 + $0x50] sm:$0xff] 0.0
          %356 = vst [vmem:[#allocation2 + $0x58] sm:$0xff] 0.0
          %357 = vst [vmem:[#allocation2 + $0x60] sm:$0xff] 0.0
          %358 = vst [vmem:[#allocation2 + $0x68] sm:$0xff] 0.0
          %359 = vst [vmem:[#allocation2 + $0x70] sm:$0xff] 0.0
          %360 = vst [vmem:[#allocation2 + $0x78] sm:$0xff] 0.0
          %361 = vst [vmem:[#allocation2 + $0x80] sm:$0xff] 0.0
          %362 = vst [vmem:[#allocation2 + $0x88] sm:$0xff] 0.0
          %363 = vst [vmem:[#allocation2 + $0x90] sm:$0xff] 0.0
          %364 = vst [vmem:[#allocation2 + $0x98] sm:$0xff] 0.0
          %365 = vst [vmem:[#allocation2 + $0xa0] sm:$0xff] 0.0
          %366 = vst [vmem:[#allocation2 + $0xa8] sm:$0xff] 0.0
          %367 = vst [vmem:[#allocation2 + $0xb0] sm:$0xff] 0.0
          %368 = vst [vmem:[#allocation2 + $0xb8] sm:$0xff] 0.0
          %369 = vst [vmem:[#allocation2 + $0xc0] sm:$0xff] 0.0
          %370 = vst [vmem:[#allocation2 + $0xc8] sm:$0xff] 0.0
          %371 = vst [vmem:[#allocation2 + $0xd0] sm:$0xff] 0.0
          %372 = vst [vmem:[#allocation2 + $0xd8] sm:$0xff] 0.0
          %373 = vst [vmem:[#allocation2 + $0xe0] sm:$0xff] 0.0
          %374 = vst [vmem:[#allocation2 + $0xe8] sm:$0xff] 0.0
          %375 = vst [vmem:[#allocation2 + $0xf0] sm:$0xff] 0.0
          %376 = vst [vmem:[#allocation2 + $0xf8] sm:$0xff] 0.0
        $region64: #{tpu_custom_call.1} parent=43 // pred_fallthru
          _
        %v377 = vld [vmem:[#allocation2] sm:$0xff]
        %v378 = vld [vmem:[#allocation2 + $0x8] sm:$0xff]
        %v379 = vld [vmem:[#allocation2 + $0x10] sm:$0xff]
        %v380 = vld [vmem:[#allocation2 + $0x18] sm:$0xff]
        %v381 = vld [vmem:[#allocation2 + $0x20] sm:$0xff]
        %v382 = vld [vmem:[#allocation2 + $0x28] sm:$0xff]
        %v383 = vld [vmem:[#allocation2 + $0x30] sm:$0xff]
        %v384 = vld [vmem:[#allocation2 + $0x38] sm:$0xff]
        %v385 = vld [vmem:[#allocation2 + $0x40] sm:$0xff]
        %v386 = vld [vmem:[#allocation2 + $0x48] sm:$0xff]
        %v387 = vld [vmem:[#allocation2 + $0x50] sm:$0xff]
        %v388 = vld [vmem:[#allocation2 + $0x58] sm:$0xff]
        %v389 = vld [vmem:[#allocation2 + $0x60] sm:$0xff]
        %v390 = vld [vmem:[#allocation2 + $0x68] sm:$0xff]
        %v391 = vld [vmem:[#allocation2 + $0x70] sm:$0xff]
        %v392 = vld [vmem:[#allocation2 + $0x78] sm:$0xff]
        %v393 = vld [vmem:[#allocation2 + $0x80] sm:$0xff]
        %v394 = vld [vmem:[#allocation2 + $0x88] sm:$0xff]
        %v395 = vld [vmem:[#allocation2 + $0x90] sm:$0xff]
        %v396 = vld [vmem:[#allocation2 + $0x98] sm:$0xff]
        %v397 = vld [vmem:[#allocation2 + $0xa0] sm:$0xff]
        %v398 = vld [vmem:[#allocation2 + $0xa8] sm:$0xff]
        %v399 = vld [vmem:[#allocation2 + $0xb0] sm:$0xff]
        %v400 = vld [vmem:[#allocation2 + $0xb8] sm:$0xff]
        %v401 = vld [vmem:[#allocation2 + $0xc0] sm:$0xff]
        %v402 = vld [vmem:[#allocation2 + $0xc8] sm:$0xff]
        %v403 = vld [vmem:[#allocation2 + $0xd0] sm:$0xff]
        %v404 = vld [vmem:[#allocation2 + $0xd8] sm:$0xff]
        %v405 = vld [vmem:[#allocation2 + $0xe0] sm:$0xff]
        %v406 = vld [vmem:[#allocation2 + $0xe8] sm:$0xff]
        %v407 = vld [vmem:[#allocation2 + $0xf0] sm:$0xff]
        %v408 = vld [vmem:[#allocation2 + $0xf8] sm:$0xff]
        %v409 = vld [vmem:[%s297] sm:$0xff]
        %v410 = vld [vmem:[%s297 + $0x8] sm:$0xff]
        %v411 = vld [vmem:[%s297 + $0x10] sm:$0xff]
        %v412 = vld [vmem:[%s297 + $0x18] sm:$0xff]
        %v413 = vld [vmem:[%s297 + $0x20] sm:$0xff]
        %v414 = vld [vmem:[%s297 + $0x28] sm:$0xff]
        %v415 = vld [vmem:[%s297 + $0x30] sm:$0xff]
        %v416 = vld [vmem:[%s297 + $0x38] sm:$0xff]
        %v417 = vld [vmem:[%s297 + $0x40] sm:$0xff]
        %v418 = vld [vmem:[%s297 + $0x48] sm:$0xff]
        %v419 = vld [vmem:[%s297 + $0x50] sm:$0xff]
        %v420 = vld [vmem:[%s297 + $0x58] sm:$0xff]
        %v421 = vld [vmem:[%s297 + $0x60] sm:$0xff]
        %v422 = vld [vmem:[%s297 + $0x68] sm:$0xff]
        %v423 = vld [vmem:[%s297 + $0x70] sm:$0xff]
        %v424 = vld [vmem:[%s297 + $0x78] sm:$0xff]
        %v425 = vld [vmem:[%s297 + $0x80] sm:$0xff]
        %v426 = vld [vmem:[%s297 + $0x88] sm:$0xff]
        %v427 = vld [vmem:[%s297 + $0x90] sm:$0xff]
        %v428 = vld [vmem:[%s297 + $0x98] sm:$0xff]
        %v429 = vld [vmem:[%s297 + $0xa0] sm:$0xff]
        %v430 = vld [vmem:[%s297 + $0xa8] sm:$0xff]
        %v431 = vld [vmem:[%s297 + $0xb0] sm:$0xff]
        %v432 = vld [vmem:[%s297 + $0xb8] sm:$0xff]
        %v433 = vld [vmem:[%s297 + $0xc0] sm:$0xff]
        %v434 = vld [vmem:[%s297 + $0xc8] sm:$0xff]
        %v435 = vld [vmem:[%s297 + $0xd0] sm:$0xff]
        %v436 = vld [vmem:[%s297 + $0xd8] sm:$0xff]
        %v437 = vld [vmem:[%s297 + $0xe0] sm:$0xff]
        %v438 = vld [vmem:[%s297 + $0xe8] sm:$0xff]
        %v439 = vld [vmem:[%s297 + $0xf0] sm:$0xff]
        %v440 = vld [vmem:[%s297 + $0xf8] sm:$0xff]
        %v441 = vld [vmem:[#allocation6] sm:$0xf]
        %v442 = vld [vmem:[#allocation6 + $0x4] sm:$0xf]
        %v443 = vld [vmem:[#allocation6 + $0x8] sm:$0xf]
        %v444 = vld [vmem:[#allocation6 + $0xc] sm:$0xf]
        %v445 = vld [vmem:[#allocation6 + $0x10] sm:$0xf]
        %v446 = vld [vmem:[#allocation6 + $0x14] sm:$0xf]
        %v447 = vld [vmem:[#allocation6 + $0x18] sm:$0xf]
        %v448 = vld [vmem:[#allocation6 + $0x1c] sm:$0xf]
        %v449 = vld [vmem:[#allocation6 + $0x20] sm:$0xf]
        %v450 = vld [vmem:[#allocation6 + $0x24] sm:$0xf]
        %v451 = vld [vmem:[#allocation6 + $0x28] sm:$0xf]
        %v452 = vld [vmem:[#allocation6 + $0x2c] sm:$0xf]
        %v453 = vld [vmem:[#allocation6 + $0x30] sm:$0xf]
        %v454 = vld [vmem:[#allocation6 + $0x34] sm:$0xf]
        %v455 = vld [vmem:[#allocation6 + $0x38] sm:$0xf]
        %v456 = vld [vmem:[#allocation6 + $0x3c] sm:$0xf]
        %v457 = vld [vmem:[#allocation6 + $0x40] sm:$0xf]
        %v458 = vld [vmem:[#allocation6 + $0x44] sm:$0xf]
        %v459 = vld [vmem:[#allocation6 + $0x48] sm:$0xf]
        %v460 = vld [vmem:[#allocation6 + $0x4c] sm:$0xf]
        %v461 = vld [vmem:[#allocation6 + $0x50] sm:$0xf]
        %v462 = vld [vmem:[#allocation6 + $0x54] sm:$0xf]
        %v463 = vld [vmem:[#allocation6 + $0x58] sm:$0xf]
        %v464 = vld [vmem:[#allocation6 + $0x5c] sm:$0xf]
        %v465 = vld [vmem:[#allocation6 + $0x60] sm:$0xf]
        %v466 = vld [vmem:[#allocation6 + $0x64] sm:$0xf]
        %v467 = vld [vmem:[#allocation6 + $0x68] sm:$0xf]
        %v468 = vld [vmem:[#allocation6 + $0x6c] sm:$0xf]
        %v469 = vld [vmem:[#allocation6 + $0x70] sm:$0xf]
        %v470 = vld [vmem:[#allocation6 + $0x74] sm:$0xf]
        %v471 = vld [vmem:[#allocation6 + $0x78] sm:$0xf]
        %v472 = vld [vmem:[#allocation6 + $0x7c] sm:$0xf]
        %v505 = vunpack.c.l.b16 %v409
        %v506 = vunpack.c.h.b16 %v409
        %v507 = vunpack.c.l.b16 %v410
        %v508 = vunpack.c.h.b16 %v410
        %v509 = vunpack.c.l.b16 %v411
        %v510 = vunpack.c.h.b16 %v411
        %v511 = vunpack.c.l.b16 %v412
        %v512 = vunpack.c.h.b16 %v412
        %v513 = vunpack.c.l.b16 %v413
        %v514 = vunpack.c.h.b16 %v413
        %v515 = vunpack.c.l.b16 %v414
        %v516 = vunpack.c.h.b16 %v414
        %v517 = vunpack.c.l.b16 %v415
        %v518 = vunpack.c.h.b16 %v415
        %v519 = vunpack.c.l.b16 %v416
        %v520 = vunpack.c.h.b16 %v416
        %v521 = vunpack.c.l.b16 %v417
        %v522 = vunpack.c.h.b16 %v417
        %v523 = vunpack.c.l.b16 %v418
        %v524 = vunpack.c.h.b16 %v418
        %v525 = vunpack.c.l.b16 %v419
        %v526 = vunpack.c.h.b16 %v419
        %v527 = vunpack.c.l.b16 %v420
        %v528 = vunpack.c.h.b16 %v420
        %v529 = vunpack.c.l.b16 %v421
        %v530 = vunpack.c.h.b16 %v421
        %v531 = vunpack.c.l.b16 %v422
        %v532 = vunpack.c.h.b16 %v422
        %v533 = vunpack.c.l.b16 %v423
        %v534 = vunpack.c.h.b16 %v423
        %v535 = vunpack.c.l.b16 %v424
        %v536 = vunpack.c.h.b16 %v424
        %v537 = vunpack.c.l.b16 %v425
        %v538 = vunpack.c.h.b16 %v425
        %v539 = vunpack.c.l.b16 %v426
        %v540 = vunpack.c.h.b16 %v426
        %v541 = vunpack.c.l.b16 %v427
        %v542 = vunpack.c.h.b16 %v427
        %v543 = vunpack.c.l.b16 %v428
        %v544 = vunpack.c.h.b16 %v428
        %v545 = vunpack.c.l.b16 %v429
        %v546 = vunpack.c.h.b16 %v429
        %v547 = vunpack.c.l.b16 %v430
        %v548 = vunpack.c.h.b16 %v430
        %v549 = vunpack.c.l.b16 %v431
        %v550 = vunpack.c.h.b16 %v431
        %v551 = vunpack.c.l.b16 %v432
        %v552 = vunpack.c.h.b16 %v432
        %v553 = vunpack.c.l.b16 %v433
        %v554 = vunpack.c.h.b16 %v433
        %v555 = vunpack.c.l.b16 %v434
        %v556 = vunpack.c.h.b16 %v434
        %v557 = vunpack.c.l.b16 %v435
        %v558 = vunpack.c.h.b16 %v435
        %v559 = vunpack.c.l.b16 %v436
        %v560 = vunpack.c.h.b16 %v436
        %v561 = vunpack.c.l.b16 %v437
        %v562 = vunpack.c.h.b16 %v437
        %v563 = vunpack.c.l.b16 %v438
        %v564 = vunpack.c.h.b16 %v438
        %v565 = vunpack.c.l.b16 %v439
        %v566 = vunpack.c.h.b16 %v439
        %v567 = vunpack.c.l.b16 %v440
        %v568 = vunpack.c.h.b16 %v440
        %v569 = vpack.c.b16 %v507, %v505
        %v570 = vpack.c.b16 %v508, %v506
        %v571 = vpack.c.b16 %v511, %v509
        %v572 = vpack.c.b16 %v512, %v510
        %v573 = vpack.c.b16 %v515, %v513
        %v574 = vpack.c.b16 %v516, %v514
        %v575 = vpack.c.b16 %v519, %v517
        %v576 = vpack.c.b16 %v520, %v518
        %v577 = vpack.c.b16 %v523, %v521
        %v578 = vpack.c.b16 %v524, %v522
        %v579 = vpack.c.b16 %v527, %v525
        %v580 = vpack.c.b16 %v528, %v526
        %v581 = vpack.c.b16 %v531, %v529
        %v582 = vpack.c.b16 %v532, %v530
        %v583 = vpack.c.b16 %v535, %v533
        %v584 = vpack.c.b16 %v536, %v534
        %v585 = vpack.c.b16 %v539, %v537
        %v586 = vpack.c.b16 %v540, %v538
        %v587 = vpack.c.b16 %v543, %v541
        %v588 = vpack.c.b16 %v544, %v542
        %v589 = vpack.c.b16 %v547, %v545
        %v590 = vpack.c.b16 %v548, %v546
        %v591 = vpack.c.b16 %v551, %v549
        %v592 = vpack.c.b16 %v552, %v550
        %v593 = vpack.c.b16 %v555, %v553
        %v594 = vpack.c.b16 %v556, %v554
        %v595 = vpack.c.b16 %v559, %v557
        %v596 = vpack.c.b16 %v560, %v558
        %v597 = vpack.c.b16 %v563, %v561
        %v598 = vpack.c.b16 %v564, %v562
        %v599 = vpack.c.b16 %v567, %v565
        %v600 = vpack.c.b16 %v568, %v566
        %v665 = vunpack.c.l.b16 %v441
        %v666 = vunpack.c.l.b16 %v442
        %v667 = vunpack.c.l.b16 %v443
        %v668 = vunpack.c.l.b16 %v444
        %v669 = vunpack.c.l.b16 %v445
        %v670 = vunpack.c.l.b16 %v446
        %v671 = vunpack.c.l.b16 %v447
        %v672 = vunpack.c.l.b16 %v448
        %v673 = vunpack.c.l.b16 %v449
        %v674 = vunpack.c.l.b16 %v450
        %v675 = vunpack.c.l.b16 %v451
        %v676 = vunpack.c.l.b16 %v452
        %v677 = vunpack.c.l.b16 %v453
        %v678 = vunpack.c.l.b16 %v454
        %v679 = vunpack.c.l.b16 %v455
        %v680 = vunpack.c.l.b16 %v456
        %v681 = vunpack.c.l.b16 %v457
        %v682 = vunpack.c.l.b16 %v458
        %v683 = vunpack.c.l.b16 %v459
        %v684 = vunpack.c.l.b16 %v460
        %v685 = vunpack.c.l.b16 %v461
        %v686 = vunpack.c.l.b16 %v462
        %v687 = vunpack.c.l.b16 %v463
        %v688 = vunpack.c.l.b16 %v464
        %v689 = vunpack.c.l.b16 %v465
        %v690 = vunpack.c.l.b16 %v466
        %v691 = vunpack.c.l.b16 %v467
        %v692 = vunpack.c.l.b16 %v468
        %v693 = vunpack.c.l.b16 %v469
        %v694 = vunpack.c.l.b16 %v470
        %v695 = vunpack.c.l.b16 %v471
        %v696 = vunpack.c.l.b16 %v472
        %v697 = vpack.c.b16 %v666, %v665
        %v698 = vpack.c.b16 %v668, %v667
        %v699 = vpack.c.b16 %v670, %v669
        %v700 = vpack.c.b16 %v672, %v671
        %v701 = vpack.c.b16 %v674, %v673
        %v702 = vpack.c.b16 %v676, %v675
        %v703 = vpack.c.b16 %v678, %v677
        %v704 = vpack.c.b16 %v680, %v679
        %v705 = vpack.c.b16 %v682, %v681
        %v706 = vpack.c.b16 %v684, %v683
        %v707 = vpack.c.b16 %v686, %v685
        %v708 = vpack.c.b16 %v688, %v687
        %v709 = vpack.c.b16 %v690, %v689
        %v710 = vpack.c.b16 %v692, %v691
        %v711 = vpack.c.b16 %v694, %v693
        %v712 = vpack.c.b16 %v696, %v695
        %729 = vmatprep.subr.bf16.mxu0 0
        %730 = vmatpush1.bf16.msra.mxu0 %v704
        %731 = vmatprep.subr.bf16.mxu0 0
        %732 = vmatpush1.bf16.msra.mxu0 %v703
        %733 = vmatprep.subr.bf16.mxu0 0
        %734 = vmatpush1.bf16.msra.mxu0 %v702
        %735 = vmatprep.subr.bf16.mxu0 0
        %736 = vmatpush1.bf16.msra.mxu0 %v701
        %737 = vmatprep.subr.bf16.mxu0 0
        %738 = vmatpush1.bf16.msra.mxu0 %v700
        %739 = vmatprep.subr.bf16.mxu0 0
        %740 = vmatpush1.bf16.msra.mxu0 %v699
        %741 = vmatprep.subr.bf16.mxu0 0
        %742 = vmatpush1.bf16.msra.mxu0 %v698
        %743 = vmatprep.subr.bf16.mxu0 0
        %744 = vmatpush1.bf16.msra.mxu0 %v697
        %745 = vmatprep.subr.bf16.mxu0 0
        %746 = vmatpush2.bf16.msra.mxu0 %v712
        %747 = vmatprep.subr.bf16.mxu0 0
        %748 = vmatpush2.bf16.msra.mxu0 %v711
        %749 = vmatprep.subr.bf16.mxu0 0
        %750 = vmatpush2.bf16.msra.mxu0 %v710
        %751 = vmatprep.subr.bf16.mxu0 0
        %752 = vmatpush2.bf16.msra.mxu0 %v709
        %753 = vmatprep.subr.bf16.mxu0 0
        %754 = vmatpush2.bf16.msra.mxu0 %v708
        %755 = vmatprep.subr.bf16.mxu0 0
        %756 = vmatpush2.bf16.msra.mxu0 %v707
        %757 = vmatprep.subr.bf16.mxu0 0
        %758 = vmatpush2.bf16.msra.mxu0 %v706
        %759 = vmatprep.subr.bf16.mxu0 0
        %760 = vmatpush2.bf16.msra.mxu0 %v705
        %761 = vmatprep.mubr.bf16.mxu0 %v570
        %762 = vmatmul.mubr.bf16.gmra.mxu0 %v569
        %v763 = vpop.f32.mrf.mxu0
        %v764 = vadd.f32 0.0, %v763
        %v765 = vpop.f32.mrf.mxu0
        %v766 = vpop.f32.mrf.mxu0
        %v767 = vadd.f32 0.0, %v766
        %v768 = vpop.f32.mrf.mxu0
        %769 = vmatprep.mubr.bf16.mxu0 %v572
        %770 = vmatmul.mubr.bf16.gmra.mxu0 %v571
        %v771 = vpop.f32.mrf.mxu0
        %v772 = vadd.f32 0.0, %v771
        %v773 = vpop.f32.mrf.mxu0
        %v774 = vpop.f32.mrf.mxu0
        %v775 = vadd.f32 0.0, %v774
        %v776 = vpop.f32.mrf.mxu0
        %777 = vmatprep.mubr.bf16.mxu0 %v574
        %778 = vmatmul.mubr.bf16.gmra.mxu0 %v573
        %v779 = vpop.f32.mrf.mxu0
        %v780 = vadd.f32 0.0, %v779
        %v781 = vpop.f32.mrf.mxu0
        %v782 = vpop.f32.mrf.mxu0
        %v783 = vadd.f32 0.0, %v782
        %v784 = vpop.f32.mrf.mxu0
        %785 = vmatprep.mubr.bf16.mxu0 %v576
        %786 = vmatmul.mubr.bf16.gmra.mxu0 %v575
        %v787 = vpop.f32.mrf.mxu0
        %v788 = vadd.f32 0.0, %v787
        %v789 = vpop.f32.mrf.mxu0
        %v790 = vpop.f32.mrf.mxu0
        %v791 = vadd.f32 0.0, %v790
        %v792 = vpop.f32.mrf.mxu0
        %793 = vmatprep.mubr.bf16.mxu0 %v578
        %794 = vmatmul.mubr.bf16.gmra.mxu0 %v577
        %v795 = vpop.f32.mrf.mxu0
        %v796 = vadd.f32 0.0, %v795
        %v797 = vpop.f32.mrf.mxu0
        %v798 = vpop.f32.mrf.mxu0
        %v799 = vadd.f32 0.0, %v798
        %v800 = vpop.f32.mrf.mxu0
        %801 = vmatprep.mubr.bf16.mxu0 %v580
        %802 = vmatmul.mubr.bf16.gmra.mxu0 %v579
        %v803 = vpop.f32.mrf.mxu0
        %v804 = vadd.f32 0.0, %v803
        %v805 = vpop.f32.mrf.mxu0
        %v806 = vpop.f32.mrf.mxu0
        %v807 = vadd.f32 0.0, %v806
        %v808 = vpop.f32.mrf.mxu0
        %809 = vmatprep.mubr.bf16.mxu0 %v582
        %810 = vmatmul.mubr.bf16.gmra.mxu0 %v581
        %v811 = vpop.f32.mrf.mxu0
        %v812 = vadd.f32 0.0, %v811
        %v813 = vpop.f32.mrf.mxu0
        %v814 = vpop.f32.mrf.mxu0
        %v815 = vadd.f32 0.0, %v814
        %v816 = vpop.f32.mrf.mxu0
        %817 = vmatprep.mubr.bf16.mxu0 %v584
        %818 = vmatmul.mubr.bf16.gmra.mxu0 %v583
        %v819 = vpop.f32.mrf.mxu0
        %v820 = vadd.f32 0.0, %v819
        %v821 = vpop.f32.mrf.mxu0
        %v822 = vpop.f32.mrf.mxu0
        %v823 = vadd.f32 0.0, %v822
        %v824 = vpop.f32.mrf.mxu0
        %825 = vmatprep.mubr.bf16.mxu0 %v586
        %826 = vmatmul.mubr.bf16.gmra.mxu0 %v585
        %v827 = vpop.f32.mrf.mxu0
        %v828 = vadd.f32 0.0, %v827
        %v829 = vpop.f32.mrf.mxu0
        %v830 = vpop.f32.mrf.mxu0
        %v831 = vadd.f32 0.0, %v830
        %v832 = vpop.f32.mrf.mxu0
        %833 = vmatprep.mubr.bf16.mxu0 %v588
        %834 = vmatmul.mubr.bf16.gmra.mxu0 %v587
        %v835 = vpop.f32.mrf.mxu0
        %v836 = vadd.f32 0.0, %v835
        %v837 = vpop.f32.mrf.mxu0
        %v838 = vpop.f32.mrf.mxu0
        %v839 = vadd.f32 0.0, %v838
        %v840 = vpop.f32.mrf.mxu0
        %841 = vmatprep.mubr.bf16.mxu0 %v590
        %842 = vmatmul.mubr.bf16.gmra.mxu0 %v589
        %v843 = vpop.f32.mrf.mxu0
        %v844 = vadd.f32 0.0, %v843
        %v845 = vpop.f32.mrf.mxu0
        %v846 = vpop.f32.mrf.mxu0
        %v847 = vadd.f32 0.0, %v846
        %v848 = vpop.f32.mrf.mxu0
        %849 = vmatprep.mubr.bf16.mxu0 %v592
        %850 = vmatmul.mubr.bf16.gmra.mxu0 %v591
        %v851 = vpop.f32.mrf.mxu0
        %v852 = vadd.f32 0.0, %v851
        %v853 = vpop.f32.mrf.mxu0
        %v854 = vpop.f32.mrf.mxu0
        %v855 = vadd.f32 0.0, %v854
        %v856 = vpop.f32.mrf.mxu0
        %857 = vmatprep.mubr.bf16.mxu0 %v594
        %858 = vmatmul.mubr.bf16.gmra.mxu0 %v593
        %v859 = vpop.f32.mrf.mxu0
        %v860 = vadd.f32 0.0, %v859
        %v861 = vpop.f32.mrf.mxu0
        %v862 = vpop.f32.mrf.mxu0
        %v863 = vadd.f32 0.0, %v862
        %v864 = vpop.f32.mrf.mxu0
        %865 = vmatprep.mubr.bf16.mxu0 %v596
        %866 = vmatmul.mubr.bf16.gmra.mxu0 %v595
        %v867 = vpop.f32.mrf.mxu0
        %v868 = vadd.f32 0.0, %v867
        %v869 = vpop.f32.mrf.mxu0
        %v870 = vpop.f32.mrf.mxu0
        %v871 = vadd.f32 0.0, %v870
        %v872 = vpop.f32.mrf.mxu0
        %873 = vmatprep.mubr.bf16.mxu0 %v598
        %874 = vmatmul.mubr.bf16.gmra.mxu0 %v597
        %v875 = vpop.f32.mrf.mxu0
        %v876 = vadd.f32 0.0, %v875
        %v877 = vpop.f32.mrf.mxu0
        %v878 = vpop.f32.mrf.mxu0
        %v879 = vadd.f32 0.0, %v878
        %v880 = vpop.f32.mrf.mxu0
        %881 = vmatprep.mubr.bf16.mxu0 %v600
        %882 = vmatmul.mubr.bf16.gmra.mxu0 %v599
        %v883 = vpop.f32.mrf.mxu0
        %v884 = vadd.f32 0.0, %v883
        %v885 = vpop.f32.mrf.mxu0
        %v886 = vpop.f32.mrf.mxu0
        %v887 = vadd.f32 0.0, %v886
        %v888 = vpop.f32.mrf.mxu0
        %889 = vdwg.mxu0
        %v890 = vadd.f32 %v377, %v764
        %v891 = vadd.f32 %v378, %v767
        %v892 = vadd.f32 %v379, %v772
        %v893 = vadd.f32 %v380, %v775
        %v894 = vadd.f32 %v381, %v780
        %v895 = vadd.f32 %v382, %v783
        %v896 = vadd.f32 %v383, %v788
        %v897 = vadd.f32 %v384, %v791
        %v898 = vadd.f32 %v385, %v796
        %v899 = vadd.f32 %v386, %v799
        %v900 = vadd.f32 %v387, %v804
        %v901 = vadd.f32 %v388, %v807
        %v902 = vadd.f32 %v389, %v812
        %v903 = vadd.f32 %v390, %v815
        %v904 = vadd.f32 %v391, %v820
        %v905 = vadd.f32 %v392, %v823
        %v906 = vadd.f32 %v393, %v828
        %v907 = vadd.f32 %v394, %v831
        %v908 = vadd.f32 %v395, %v836
        %v909 = vadd.f32 %v396, %v839
        %v910 = vadd.f32 %v397, %v844
        %v911 = vadd.f32 %v398, %v847
        %v912 = vadd.f32 %v399, %v852
        %v913 = vadd.f32 %v400, %v855
        %v914 = vadd.f32 %v401, %v860
        %v915 = vadd.f32 %v402, %v863
        %v916 = vadd.f32 %v403, %v868
        %v917 = vadd.f32 %v404, %v871
        %v918 = vadd.f32 %v405, %v876
        %v919 = vadd.f32 %v406, %v879
        %v920 = vadd.f32 %v407, %v884
        %v921 = vadd.f32 %v408, %v887
        %922 = vst [vmem:[#allocation2] sm:$0xff] %v890
        %923 = vst [vmem:[#allocation2 + $0x8] sm:$0xff] %v891
        %924 = vst [vmem:[#allocation2 + $0x10] sm:$0xff] %v892
        %925 = vst [vmem:[#allocation2 + $0x18] sm:$0xff] %v893
        %926 = vst [vmem:[#allocation2 + $0x20] sm:$0xff] %v894
        %927 = vst [vmem:[#allocation2 + $0x28] sm:$0xff] %v895
        %928 = vst [vmem:[#allocation2 + $0x30] sm:$0xff] %v896
        %929 = vst [vmem:[#allocation2 + $0x38] sm:$0xff] %v897
        %930 = vst [vmem:[#allocation2 + $0x40] sm:$0xff] %v898
        %931 = vst [vmem:[#allocation2 + $0x48] sm:$0xff] %v899
        %932 = vst [vmem:[#allocation2 + $0x50] sm:$0xff] %v900
        %933 = vst [vmem:[#allocation2 + $0x58] sm:$0xff] %v901
        %934 = vst [vmem:[#allocation2 + $0x60] sm:$0xff] %v902
        %935 = vst [vmem:[#allocation2 + $0x68] sm:$0xff] %v903
        %936 = vst [vmem:[#allocation2 + $0x70] sm:$0xff] %v904
        %937 = vst [vmem:[#allocation2 + $0x78] sm:$0xff] %v905
        %938 = vst [vmem:[#allocation2 + $0x80] sm:$0xff] %v906
        %939 = vst [vmem:[#allocation2 + $0x88] sm:$0xff] %v907
        %940 = vst [vmem:[#allocation2 + $0x90] sm:$0xff] %v908
        %941 = vst [vmem:[#allocation2 + $0x98] sm:$0xff] %v909
        %942 = vst [vmem:[#allocation2 + $0xa0] sm:$0xff] %v910
        %943 = vst [vmem:[#allocation2 + $0xa8] sm:$0xff] %v911
        %944 = vst [vmem:[#allocation2 + $0xb0] sm:$0xff] %v912
        %945 = vst [vmem:[#allocation2 + $0xb8] sm:$0xff] %v913
        %946 = vst [vmem:[#allocation2 + $0xc0] sm:$0xff] %v914
        %947 = vst [vmem:[#allocation2 + $0xc8] sm:$0xff] %v915
        %948 = vst [vmem:[#allocation2 + $0xd0] sm:$0xff] %v916
        %949 = vst [vmem:[#allocation2 + $0xd8] sm:$0xff] %v917
        %950 = vst [vmem:[#allocation2 + $0xe0] sm:$0xff] %v918
        %951 = vst [vmem:[#allocation2 + $0xe8] sm:$0xff] %v919
        %952 = vst [vmem:[#allocation2 + $0xf0] sm:$0xff] %v920
        %953 = vst [vmem:[#allocation2 + $0xf8] sm:$0xff] %v921
        // Predicated region
        $region65: #{tpu_custom_call.1} parent=43 // pred_check
          %p954 = pneg %p341
        $region66: #{tpu_custom_call.1} parent=43 // pred_check_branch
          %956 = sbr.rel (%p954) target = $region68
        $region67: #{tpu_custom_call.1} parent=43 // pred_region
          %v957 = vld [vmem:[#allocation2] sm:$0xff]
          %v958 = vld [vmem:[#allocation2 + $0x8] sm:$0xff]
          %v959 = vld [vmem:[#allocation2 + $0x10] sm:$0xff]
          %v960 = vld [vmem:[#allocation2 + $0x18] sm:$0xff]
          %v961 = vld [vmem:[#allocation2 + $0x20] sm:$0xff]
          %v962 = vld [vmem:[#allocation2 + $0x28] sm:$0xff]
          %v963 = vld [vmem:[#allocation2 + $0x30] sm:$0xff]
          %v964 = vld [vmem:[#allocation2 + $0x38] sm:$0xff]
          %v965 = vld [vmem:[#allocation2 + $0x40] sm:$0xff]
          %v966 = vld [vmem:[#allocation2 + $0x48] sm:$0xff]
          %v967 = vld [vmem:[#allocation2 + $0x50] sm:$0xff]
          %v968 = vld [vmem:[#allocation2 + $0x58] sm:$0xff]
          %v969 = vld [vmem:[#allocation2 + $0x60] sm:$0xff]
          %v970 = vld [vmem:[#allocation2 + $0x68] sm:$0xff]
          %v971 = vld [vmem:[#allocation2 + $0x70] sm:$0xff]
          %v972 = vld [vmem:[#allocation2 + $0x78] sm:$0xff]
          %v973 = vld [vmem:[#allocation2 + $0x80] sm:$0xff]
          %v974 = vld [vmem:[#allocation2 + $0x88] sm:$0xff]
          %v975 = vld [vmem:[#allocation2 + $0x90] sm:$0xff]
          %v976 = vld [vmem:[#allocation2 + $0x98] sm:$0xff]
          %v977 = vld [vmem:[#allocation2 + $0xa0] sm:$0xff]
          %v978 = vld [vmem:[#allocation2 + $0xa8] sm:$0xff]
          %v979 = vld [vmem:[#allocation2 + $0xb0] sm:$0xff]
          %v980 = vld [vmem:[#allocation2 + $0xb8] sm:$0xff]
          %v981 = vld [vmem:[#allocation2 + $0xc0] sm:$0xff]
          %v982 = vld [vmem:[#allocation2 + $0xc8] sm:$0xff]
          %v983 = vld [vmem:[#allocation2 + $0xd0] sm:$0xff]
          %v984 = vld [vmem:[#allocation2 + $0xd8] sm:$0xff]
          %v985 = vld [vmem:[#allocation2 + $0xe0] sm:$0xff]
          %v986 = vld [vmem:[#allocation2 + $0xe8] sm:$0xff]
          %v987 = vld [vmem:[#allocation2 + $0xf0] sm:$0xff]
          %v988 = vld [vmem:[#allocation2 + $0xf8] sm:$0xff]
          %v989 = vpack.c.bf16 %v958, %v957
          %v990 = vpack.c.bf16 %v960, %v959
          %v991 = vpack.c.bf16 %v962, %v961
          %v992 = vpack.c.bf16 %v964, %v963
          %v993 = vpack.c.bf16 %v966, %v965
          %v994 = vpack.c.bf16 %v968, %v967
          %v995 = vpack.c.bf16 %v970, %v969
          %v996 = vpack.c.bf16 %v972, %v971
          %v997 = vpack.c.bf16 %v974, %v973
          %v998 = vpack.c.bf16 %v976, %v975
          %v999 = vpack.c.bf16 %v978, %v977
          %v1000 = vpack.c.bf16 %v980, %v979
          %v1001 = vpack.c.bf16 %v982, %v981
          %v1002 = vpack.c.bf16 %v984, %v983
          %v1003 = vpack.c.bf16 %v986, %v985
          %v1004 = vpack.c.bf16 %v988, %v987
          %v1005 = vld [vmem:[%s2] sm:$0xff]
          %v1006 = vld [vmem:[%s2 + $0x8] sm:$0xff]
          %v1007 = vld [vmem:[%s2 + $0x10] sm:$0xff]
          %v1008 = vld [vmem:[%s2 + $0x18] sm:$0xff]
          %v1009 = vld [vmem:[%s2 + $0x20] sm:$0xff]
          %v1010 = vld [vmem:[%s2 + $0x28] sm:$0xff]
          %v1011 = vld [vmem:[%s2 + $0x30] sm:$0xff]
          %v1012 = vld [vmem:[%s2 + $0x38] sm:$0xff]
          %v1013 = vld [vmem:[%s2 + $0x40] sm:$0xff]
          %v1014 = vld [vmem:[%s2 + $0x48] sm:$0xff]
          %v1015 = vld [vmem:[%s2 + $0x50] sm:$0xff]
          %v1016 = vld [vmem:[%s2 + $0x58] sm:$0xff]
          %v1017 = vld [vmem:[%s2 + $0x60] sm:$0xff]
          %v1018 = vld [vmem:[%s2 + $0x68] sm:$0xff]
          %v1019 = vld [vmem:[%s2 + $0x70] sm:$0xff]
          %v1020 = vld [vmem:[%s2 + $0x78] sm:$0xff]
          %v1021 = vld [vmem:[%s2 + $0x80] sm:$0xff]
          %v1022 = vld [vmem:[%s2 + $0x88] sm:$0xff]
          %v1023 = vld [vmem:[%s2 + $0x90] sm:$0xff]
          %v1024 = vld [vmem:[%s2 + $0x98] sm:$0xff]
          %v1025 = vld [vmem:[%s2 + $0xa0] sm:$0xff]
          %v1026 = vld [vmem:[%s2 + $0xa8] sm:$0xff]
          %v1027 = vld [vmem:[%s2 + $0xb0] sm:$0xff]
          %v1028 = vld [vmem:[%s2 + $0xb8] sm:$0xff]
          %v1029 = vld [vmem:[%s2 + $0xc0] sm:$0xff]
          %v1030 = vld [vmem:[%s2 + $0xc8] sm:$0xff]
          %v1031 = vld [vmem:[%s2 + $0xd0] sm:$0xff]
          %v1032 = vld [vmem:[%s2 + $0xd8] sm:$0xff]
          %v1033 = vld [vmem:[%s2 + $0xe0] sm:$0xff]
          %v1034 = vld [vmem:[%s2 + $0xe8] sm:$0xff]
          %v1035 = vld [vmem:[%s2 + $0xf0] sm:$0xff]
          %v1036 = vld [vmem:[%s2 + $0xf8] sm:$0xff]
          %v1037 = vld [vmem:[%s3] sm:$0xff]
          %v1038 = vld [vmem:[%s3 + $0x8] sm:$0xff]
          %v1039 = vld [vmem:[%s3 + $0x10] sm:$0xff]
          %v1040 = vld [vmem:[%s3 + $0x18] sm:$0xff]
          %v1041 = vld [vmem:[%s3 + $0x20] sm:$0xff]
          %v1042 = vld [vmem:[%s3 + $0x28] sm:$0xff]
          %v1043 = vld [vmem:[%s3 + $0x30] sm:$0xff]
          %v1044 = vld [vmem:[%s3 + $0x38] sm:$0xff]
          %v1045 = vld [vmem:[%s3 + $0x40] sm:$0xff]
          %v1046 = vld [vmem:[%s3 + $0x48] sm:$0xff]
          %v1047 = vld [vmem:[%s3 + $0x50] sm:$0xff]
          %v1048 = vld [vmem:[%s3 + $0x58] sm:$0xff]
          %v1049 = vld [vmem:[%s3 + $0x60] sm:$0xff]
          %v1050 = vld [vmem:[%s3 + $0x68] sm:$0xff]
          %v1051 = vld [vmem:[%s3 + $0x70] sm:$0xff]
          %v1052 = vld [vmem:[%s3 + $0x78] sm:$0xff]
          %v1053 = vld [vmem:[%s3 + $0x80] sm:$0xff]
          %v1054 = vld [vmem:[%s3 + $0x88] sm:$0xff]
          %v1055 = vld [vmem:[%s3 + $0x90] sm:$0xff]
          %v1056 = vld [vmem:[%s3 + $0x98] sm:$0xff]
          %v1057 = vld [vmem:[%s3 + $0xa0] sm:$0xff]
          %v1058 = vld [vmem:[%s3 + $0xa8] sm:$0xff]
          %v1059 = vld [vmem:[%s3 + $0xb0] sm:$0xff]
          %v1060 = vld [vmem:[%s3 + $0xb8] sm:$0xff]
          %v1061 = vld [vmem:[%s3 + $0xc0] sm:$0xff]
          %v1062 = vld [vmem:[%s3 + $0xc8] sm:$0xff]
          %v1063 = vld [vmem:[%s3 + $0xd0] sm:$0xff]
          %v1064 = vld [vmem:[%s3 + $0xd8] sm:$0xff]
          %v1065 = vld [vmem:[%s3 + $0xe0] sm:$0xff]
          %v1066 = vld [vmem:[%s3 + $0xe8] sm:$0xff]
          %v1067 = vld [vmem:[%s3 + $0xf0] sm:$0xff]
          %v1068 = vld [vmem:[%s3 + $0xf8] sm:$0xff]
          %1070 = vset.pattern.permute.xlu0 0
          %1071 = vperm.xlu0 %1070, %v1037
          %v1072 = vpop.permute.xlu0 %1071
          %1075 = vset.pattern.permute.xlu0 0
          %1076 = vperm.xlu0 %1075, %v1038
          %v1077 = vpop.permute.xlu0 %1076
          %1080 = vset.pattern.permute.xlu0 0
          %1081 = vperm.xlu0 %1080, %v1039
          %v1082 = vpop.permute.xlu0 %1081
          %1085 = vset.pattern.permute.xlu0 0
          %1086 = vperm.xlu0 %1085, %v1040
          %v1087 = vpop.permute.xlu0 %1086
          %1090 = vset.pattern.permute.xlu0 0
          %1091 = vperm.xlu0 %1090, %v1041
          %v1092 = vpop.permute.xlu0 %1091
          %1095 = vset.pattern.permute.xlu0 0
          %1096 = vperm.xlu0 %1095, %v1042
          %v1097 = vpop.permute.xlu0 %1096
          %1100 = vset.pattern.permute.xlu0 0
          %1101 = vperm.xlu0 %1100, %v1043
          %v1102 = vpop.permute.xlu0 %1101
          %1105 = vset.pattern.permute.xlu0 0
          %1106 = vperm.xlu0 %1105, %v1044
          %v1107 = vpop.permute.xlu0 %1106
          %1110 = vset.pattern.permute.xlu0 0
          %1111 = vperm.xlu0 %1110, %v1045
          %v1112 = vpop.permute.xlu0 %1111
          %1115 = vset.pattern.permute.xlu0 0
          %1116 = vperm.xlu0 %1115, %v1046
          %v1117 = vpop.permute.xlu0 %1116
          %1120 = vset.pattern.permute.xlu0 0
          %1121 = vperm.xlu0 %1120, %v1047
          %v1122 = vpop.permute.xlu0 %1121
          %1125 = vset.pattern.permute.xlu0 0
          %1126 = vperm.xlu0 %1125, %v1048
          %v1127 = vpop.permute.xlu0 %1126
          %1130 = vset.pattern.permute.xlu0 0
          %1131 = vperm.xlu0 %1130, %v1049
          %v1132 = vpop.permute.xlu0 %1131
          %1135 = vset.pattern.permute.xlu0 0
          %1136 = vperm.xlu0 %1135, %v1050
          %v1137 = vpop.permute.xlu0 %1136
          %1140 = vset.pattern.permute.xlu0 0
          %1141 = vperm.xlu0 %1140, %v1051
          %v1142 = vpop.permute.xlu0 %1141
          %1145 = vset.pattern.permute.xlu0 0
          %1146 = vperm.xlu0 %1145, %v1052
          %v1147 = vpop.permute.xlu0 %1146
          %1150 = vset.pattern.permute.xlu0 0
          %1151 = vperm.xlu0 %1150, %v1053
          %v1152 = vpop.permute.xlu0 %1151
          %1155 = vset.pattern.permute.xlu0 0
          %1156 = vperm.xlu0 %1155, %v1054
          %v1157 = vpop.permute.xlu0 %1156
          %1160 = vset.pattern.permute.xlu0 0
          %1161 = vperm.xlu0 %1160, %v1055
          %v1162 = vpop.permute.xlu0 %1161
          %1165 = vset.pattern.permute.xlu0 0
          %1166 = vperm.xlu0 %1165, %v1056
          %v1167 = vpop.permute.xlu0 %1166
          %1170 = vset.pattern.permute.xlu0 0
          %1171 = vperm.xlu0 %1170, %v1057
          %v1172 = vpop.permute.xlu0 %1171
          %1175 = vset.pattern.permute.xlu0 0
          %1176 = vperm.xlu0 %1175, %v1058
          %v1177 = vpop.permute.xlu0 %1176
          %1180 = vset.pattern.permute.xlu0 0
          %1181 = vperm.xlu0 %1180, %v1059
          %v1182 = vpop.permute.xlu0 %1181
          %1185 = vset.pattern.permute.xlu0 0
          %1186 = vperm.xlu0 %1185, %v1060
          %v1187 = vpop.permute.xlu0 %1186
          %1190 = vset.pattern.permute.xlu0 0
          %1191 = vperm.xlu0 %1190, %v1061
          %v1192 = vpop.permute.xlu0 %1191
          %1195 = vset.pattern.permute.xlu0 0
          %1196 = vperm.xlu0 %1195, %v1062
          %v1197 = vpop.permute.xlu0 %1196
          %1200 = vset.pattern.permute.xlu0 0
          %1201 = vperm.xlu0 %1200, %v1063
          %v1202 = vpop.permute.xlu0 %1201
          %1205 = vset.pattern.permute.xlu0 0
          %1206 = vperm.xlu0 %1205, %v1064
          %v1207 = vpop.permute.xlu0 %1206
          %1210 = vset.pattern.permute.xlu0 0
          %1211 = vperm.xlu0 %1210, %v1065
          %v1212 = vpop.permute.xlu0 %1211
          %1215 = vset.pattern.permute.xlu0 0
          %1216 = vperm.xlu0 %1215, %v1066
          %v1217 = vpop.permute.xlu0 %1216
          %1220 = vset.pattern.permute.xlu0 0
          %1221 = vperm.xlu0 %1220, %v1067
          %v1222 = vpop.permute.xlu0 %1221
          %1225 = vset.pattern.permute.xlu0 0
          %1226 = vperm.xlu0 %1225, %v1068
          %v1227 = vpop.permute.xlu0 %1226
          %v1261 = vunpack.c.l.b16 %v1005
          %v1262 = vunpack.c.h.b16 %v1005
          %v1263 = vunpack.c.l.b16 %v1006
          %v1264 = vunpack.c.h.b16 %v1006
          %v1265 = vunpack.c.l.b16 %v1007
          %v1266 = vunpack.c.h.b16 %v1007
          %v1267 = vunpack.c.l.b16 %v1008
          %v1268 = vunpack.c.h.b16 %v1008
          %v1269 = vunpack.c.l.b16 %v1009
          %v1270 = vunpack.c.h.b16 %v1009
          %v1271 = vunpack.c.l.b16 %v1010
          %v1272 = vunpack.c.h.b16 %v1010
          %v1273 = vunpack.c.l.b16 %v1011
          %v1274 = vunpack.c.h.b16 %v1011
          %v1275 = vunpack.c.l.b16 %v1012
          %v1276 = vunpack.c.h.b16 %v1012
          %v1277 = vunpack.c.l.b16 %v1013
          %v1278 = vunpack.c.h.b16 %v1013
          %v1279 = vunpack.c.l.b16 %v1014
          %v1280 = vunpack.c.h.b16 %v1014
          %v1281 = vunpack.c.l.b16 %v1015
          %v1282 = vunpack.c.h.b16 %v1015
          %v1283 = vunpack.c.l.b16 %v1016
          %v1284 = vunpack.c.h.b16 %v1016
          %v1285 = vunpack.c.l.b16 %v1017
          %v1286 = vunpack.c.h.b16 %v1017
          %v1287 = vunpack.c.l.b16 %v1018
          %v1288 = vunpack.c.h.b16 %v1018
          %v1289 = vunpack.c.l.b16 %v1019
          %v1290 = vunpack.c.h.b16 %v1019
          %v1291 = vunpack.c.l.b16 %v1020
          %v1292 = vunpack.c.h.b16 %v1020
          %v1293 = vunpack.c.l.b16 %v1021
          %v1294 = vunpack.c.h.b16 %v1021
          %v1295 = vunpack.c.l.b16 %v1022
          %v1296 = vunpack.c.h.b16 %v1022
          %v1297 = vunpack.c.l.b16 %v1023
          %v1298 = vunpack.c.h.b16 %v1023
          %v1299 = vunpack.c.l.b16 %v1024
          %v1300 = vunpack.c.h.b16 %v1024
          %v1301 = vunpack.c.l.b16 %v1025
          %v1302 = vunpack.c.h.b16 %v1025
          %v1303 = vunpack.c.l.b16 %v1026
          %v1304 = vunpack.c.h.b16 %v1026
          %v1305 = vunpack.c.l.b16 %v1027
          %v1306 = vunpack.c.h.b16 %v1027
          %v1307 = vunpack.c.l.b16 %v1028
          %v1308 = vunpack.c.h.b16 %v1028
          %v1309 = vunpack.c.l.b16 %v1029
          %v1310 = vunpack.c.h.b16 %v1029
          %v1311 = vunpack.c.l.b16 %v1030
          %v1312 = vunpack.c.h.b16 %v1030
          %v1313 = vunpack.c.l.b16 %v1031
          %v1314 = vunpack.c.h.b16 %v1031
          %v1315 = vunpack.c.l.b16 %v1032
          %v1316 = vunpack.c.h.b16 %v1032
          %v1317 = vunpack.c.l.b16 %v1033
          %v1318 = vunpack.c.h.b16 %v1033
          %v1319 = vunpack.c.l.b16 %v1034
          %v1320 = vunpack.c.h.b16 %v1034
          %v1321 = vunpack.c.l.b16 %v1035
          %v1322 = vunpack.c.h.b16 %v1035
          %v1323 = vunpack.c.l.b16 %v1036
          %v1324 = vunpack.c.h.b16 %v1036
          %v1325 = vpack.c.b16 %v1263, %v1261
          %v1326 = vpack.c.b16 %v1264, %v1262
          %v1327 = vpack.c.b16 %v1267, %v1265
          %v1328 = vpack.c.b16 %v1268, %v1266
          %v1329 = vpack.c.b16 %v1271, %v1269
          %v1330 = vpack.c.b16 %v1272, %v1270
          %v1331 = vpack.c.b16 %v1275, %v1273
          %v1332 = vpack.c.b16 %v1276, %v1274
          %v1333 = vpack.c.b16 %v1279, %v1277
          %v1334 = vpack.c.b16 %v1280, %v1278
          %v1335 = vpack.c.b16 %v1283, %v1281
          %v1336 = vpack.c.b16 %v1284, %v1282
          %v1337 = vpack.c.b16 %v1287, %v1285
          %v1338 = vpack.c.b16 %v1288, %v1286
          %v1339 = vpack.c.b16 %v1291, %v1289
          %v1340 = vpack.c.b16 %v1292, %v1290
          %v1341 = vpack.c.b16 %v1295, %v1293
          %v1342 = vpack.c.b16 %v1296, %v1294
          %v1343 = vpack.c.b16 %v1299, %v1297
          %v1344 = vpack.c.b16 %v1300, %v1298
          %v1345 = vpack.c.b16 %v1303, %v1301
          %v1346 = vpack.c.b16 %v1304, %v1302
          %v1347 = vpack.c.b16 %v1307, %v1305
          %v1348 = vpack.c.b16 %v1308, %v1306
          %v1349 = vpack.c.b16 %v1311, %v1309
          %v1350 = vpack.c.b16 %v1312, %v1310
          %v1351 = vpack.c.b16 %v1315, %v1313
          %v1352 = vpack.c.b16 %v1316, %v1314
          %v1353 = vpack.c.b16 %v1319, %v1317
          %v1354 = vpack.c.b16 %v1320, %v1318
          %v1355 = vpack.c.b16 %v1323, %v1321
          %v1356 = vpack.c.b16 %v1324, %v1322
          %1389 = vmatprep.subr.bf16.mxu0 0
          %1390 = vmatpush1.bf16.msra.mxu0 %v996
          %1391 = vmatprep.subr.bf16.mxu0 0
          %1392 = vmatpush1.bf16.msra.mxu0 %v995
          %1393 = vmatprep.subr.bf16.mxu0 0
          %1394 = vmatpush1.bf16.msra.mxu0 %v994
          %1395 = vmatprep.subr.bf16.mxu0 0
          %1396 = vmatpush1.bf16.msra.mxu0 %v993
          %1397 = vmatprep.subr.bf16.mxu0 0
          %1398 = vmatpush1.bf16.msra.mxu0 %v992
          %1399 = vmatprep.subr.bf16.mxu0 0
          %1400 = vmatpush1.bf16.msra.mxu0 %v991
          %1401 = vmatprep.subr.bf16.mxu0 0
          %1402 = vmatpush1.bf16.msra.mxu0 %v990
          %1403 = vmatprep.subr.bf16.mxu0 0
          %1404 = vmatpush1.bf16.msra.mxu0 %v989
          %1405 = vmatprep.subr.bf16.mxu0 0
          %1406 = vmatpush2.bf16.msra.mxu0 %v1004
          %1407 = vmatprep.subr.bf16.mxu0 0
          %1408 = vmatpush2.bf16.msra.mxu0 %v1003
          %1409 = vmatprep.subr.bf16.mxu0 0
          %1410 = vmatpush2.bf16.msra.mxu0 %v1002
          %1411 = vmatprep.subr.bf16.mxu0 0
          %1412 = vmatpush2.bf16.msra.mxu0 %v1001
          %1413 = vmatprep.subr.bf16.mxu0 0
          %1414 = vmatpush2.bf16.msra.mxu0 %v1000
          %1415 = vmatprep.subr.bf16.mxu0 0
          %1416 = vmatpush2.bf16.msra.mxu0 %v999
          %1417 = vmatprep.subr.bf16.mxu0 0
          %1418 = vmatpush2.bf16.msra.mxu0 %v998
          %1419 = vmatprep.subr.bf16.mxu0 0
          %1420 = vmatpush2.bf16.msra.mxu0 %v997
          %1421 = vmatprep.mubr.bf16.mxu0 %v1326
          %1422 = vmatmul.mubr.bf16.gmra.mxu0 %v1325
          %v1423 = vpop.f32.mrf.mxu0
          %v1424 = vadd.f32 %v1072, %v1423
          %v1425 = vpop.f32.mrf.mxu0
          %v1426 = vpop.f32.mrf.mxu0
          %v1427 = vadd.f32 %v1077, %v1426
          %v1428 = vpop.f32.mrf.mxu0
          %1429 = vmatprep.mubr.bf16.mxu0 %v1328
          %1430 = vmatmul.mubr.bf16.gmra.mxu0 %v1327
          %v1431 = vpop.f32.mrf.mxu0
          %v1432 = vadd.f32 %v1082, %v1431
          %v1433 = vpop.f32.mrf.mxu0
          %v1434 = vpop.f32.mrf.mxu0
          %v1435 = vadd.f32 %v1087, %v1434
          %v1436 = vpop.f32.mrf.mxu0
          %1437 = vmatprep.mubr.bf16.mxu0 %v1330
          %1438 = vmatmul.mubr.bf16.gmra.mxu0 %v1329
          %v1439 = vpop.f32.mrf.mxu0
          %v1440 = vadd.f32 %v1092, %v1439
          %v1441 = vpop.f32.mrf.mxu0
          %v1442 = vpop.f32.mrf.mxu0
          %v1443 = vadd.f32 %v1097, %v1442
          %v1444 = vpop.f32.mrf.mxu0
          %1445 = vmatprep.mubr.bf16.mxu0 %v1332
          %1446 = vmatmul.mubr.bf16.gmra.mxu0 %v1331
          %v1447 = vpop.f32.mrf.mxu0
          %v1448 = vadd.f32 %v1102, %v1447
          %v1449 = vpop.f32.mrf.mxu0
          %v1450 = vpop.f32.mrf.mxu0
          %v1451 = vadd.f32 %v1107, %v1450
          %v1452 = vpop.f32.mrf.mxu0
          %1453 = vmatprep.mubr.bf16.mxu0 %v1334
          %1454 = vmatmul.mubr.bf16.gmra.mxu0 %v1333
          %v1455 = vpop.f32.mrf.mxu0
          %v1456 = vadd.f32 %v1112, %v1455
          %v1457 = vpop.f32.mrf.mxu0
          %v1458 = vpop.f32.mrf.mxu0
          %v1459 = vadd.f32 %v1117, %v1458
          %v1460 = vpop.f32.mrf.mxu0
          %1461 = vmatprep.mubr.bf16.mxu0 %v1336
          %1462 = vmatmul.mubr.bf16.gmra.mxu0 %v1335
          %v1463 = vpop.f32.mrf.mxu0
          %v1464 = vadd.f32 %v1122, %v1463
          %v1465 = vpop.f32.mrf.mxu0
          %v1466 = vpop.f32.mrf.mxu0
          %v1467 = vadd.f32 %v1127, %v1466
          %v1468 = vpop.f32.mrf.mxu0
          %1469 = vmatprep.mubr.bf16.mxu0 %v1338
          %1470 = vmatmul.mubr.bf16.gmra.mxu0 %v1337
          %v1471 = vpop.f32.mrf.mxu0
          %v1472 = vadd.f32 %v1132, %v1471
          %v1473 = vpop.f32.mrf.mxu0
          %v1474 = vpop.f32.mrf.mxu0
          %v1475 = vadd.f32 %v1137, %v1474
          %v1476 = vpop.f32.mrf.mxu0
          %1477 = vmatprep.mubr.bf16.mxu0 %v1340
          %1478 = vmatmul.mubr.bf16.gmra.mxu0 %v1339
          %v1479 = vpop.f32.mrf.mxu0
          %v1480 = vadd.f32 %v1142, %v1479
          %v1481 = vpop.f32.mrf.mxu0
          %v1482 = vpop.f32.mrf.mxu0
          %v1483 = vadd.f32 %v1147, %v1482
          %v1484 = vpop.f32.mrf.mxu0
          %1485 = vmatprep.mubr.bf16.mxu0 %v1342
          %1486 = vmatmul.mubr.bf16.gmra.mxu0 %v1341
          %v1487 = vpop.f32.mrf.mxu0
          %v1488 = vadd.f32 %v1152, %v1487
          %v1489 = vpop.f32.mrf.mxu0
          %v1490 = vpop.f32.mrf.mxu0
          %v1491 = vadd.f32 %v1157, %v1490
          %v1492 = vpop.f32.mrf.mxu0
          %1493 = vmatprep.mubr.bf16.mxu0 %v1344
          %1494 = vmatmul.mubr.bf16.gmra.mxu0 %v1343
          %v1495 = vpop.f32.mrf.mxu0
          %v1496 = vadd.f32 %v1162, %v1495
          %v1497 = vpop.f32.mrf.mxu0
          %v1498 = vpop.f32.mrf.mxu0
          %v1499 = vadd.f32 %v1167, %v1498
          %v1500 = vpop.f32.mrf.mxu0
          %1501 = vmatprep.mubr.bf16.mxu0 %v1346
          %1502 = vmatmul.mubr.bf16.gmra.mxu0 %v1345
          %v1503 = vpop.f32.mrf.mxu0
          %v1504 = vadd.f32 %v1172, %v1503
          %v1505 = vpop.f32.mrf.mxu0
          %v1506 = vpop.f32.mrf.mxu0
          %v1507 = vadd.f32 %v1177, %v1506
          %v1508 = vpop.f32.mrf.mxu0
          %1509 = vmatprep.mubr.bf16.mxu0 %v1348
          %1510 = vmatmul.mubr.bf16.gmra.mxu0 %v1347
          %v1511 = vpop.f32.mrf.mxu0
          %v1512 = vadd.f32 %v1182, %v1511
          %v1513 = vpop.f32.mrf.mxu0
          %v1514 = vpop.f32.mrf.mxu0
          %v1515 = vadd.f32 %v1187, %v1514
          %v1516 = vpop.f32.mrf.mxu0
          %1517 = vmatprep.mubr.bf16.mxu0 %v1350
          %1518 = vmatmul.mubr.bf16.gmra.mxu0 %v1349
          %v1519 = vpop.f32.mrf.mxu0
          %v1520 = vadd.f32 %v1192, %v1519
          %v1521 = vpop.f32.mrf.mxu0
          %v1522 = vpop.f32.mrf.mxu0
          %v1523 = vadd.f32 %v1197, %v1522
          %v1524 = vpop.f32.mrf.mxu0
          %1525 = vmatprep.mubr.bf16.mxu0 %v1352
          %1526 = vmatmul.mubr.bf16.gmra.mxu0 %v1351
          %v1527 = vpop.f32.mrf.mxu0
          %v1528 = vadd.f32 %v1202, %v1527
          %v1529 = vpop.f32.mrf.mxu0
          %v1530 = vpop.f32.mrf.mxu0
          %v1531 = vadd.f32 %v1207, %v1530
          %v1532 = vpop.f32.mrf.mxu0
          %1533 = vmatprep.mubr.bf16.mxu0 %v1354
          %1534 = vmatmul.mubr.bf16.gmra.mxu0 %v1353
          %v1535 = vpop.f32.mrf.mxu0
          %v1536 = vadd.f32 %v1212, %v1535
          %v1537 = vpop.f32.mrf.mxu0
          %v1538 = vpop.f32.mrf.mxu0
          %v1539 = vadd.f32 %v1217, %v1538
          %v1540 = vpop.f32.mrf.mxu0
          %1541 = vmatprep.mubr.bf16.mxu0 %v1356
          %1542 = vmatmul.mubr.bf16.gmra.mxu0 %v1355
          %v1543 = vpop.f32.mrf.mxu0
          %v1544 = vadd.f32 %v1222, %v1543
          %v1545 = vpop.f32.mrf.mxu0
          %v1546 = vpop.f32.mrf.mxu0
          %v1547 = vadd.f32 %v1227, %v1546
          %v1548 = vpop.f32.mrf.mxu0
          %1549 = vdwg.mxu0
          %v1550 = vmax.f32 %v1424, 0.0
          %v1551 = vmax.f32 %v1427, 0.0
          %v1552 = vmax.f32 %v1432, 0.0
          %v1553 = vmax.f32 %v1435, 0.0
          %v1554 = vmax.f32 %v1440, 0.0
          %v1555 = vmax.f32 %v1443, 0.0
          %v1556 = vmax.f32 %v1448, 0.0
          %v1557 = vmax.f32 %v1451, 0.0
          %v1558 = vmax.f32 %v1456, 0.0
          %v1559 = vmax.f32 %v1459, 0.0
          %v1560 = vmax.f32 %v1464, 0.0
          %v1561 = vmax.f32 %v1467, 0.0
          %v1562 = vmax.f32 %v1472, 0.0
          %v1563 = vmax.f32 %v1475, 0.0
          %v1564 = vmax.f32 %v1480, 0.0
          %v1565 = vmax.f32 %v1483, 0.0
          %v1566 = vmax.f32 %v1488, 0.0
          %v1567 = vmax.f32 %v1491, 0.0
          %v1568 = vmax.f32 %v1496, 0.0
          %v1569 = vmax.f32 %v1499, 0.0
          %v1570 = vmax.f32 %v1504, 0.0
          %v1571 = vmax.f32 %v1507, 0.0
          %v1572 = vmax.f32 %v1512, 0.0
          %v1573 = vmax.f32 %v1515, 0.0
          %v1574 = vmax.f32 %v1520, 0.0
          %v1575 = vmax.f32 %v1523, 0.0
          %v1576 = vmax.f32 %v1528, 0.0
          %v1577 = vmax.f32 %v1531, 0.0
          %v1578 = vmax.f32 %v1536, 0.0
          %v1579 = vmax.f32 %v1539, 0.0
          %v1580 = vmax.f32 %v1544, 0.0
          %v1581 = vmax.f32 %v1547, 0.0
          %v1582 = vld [vmem:[#allocation8] sm:$0xf]
          %v1583 = vld [vmem:[#allocation8 + $0x4] sm:$0xf]
          %v1584 = vld [vmem:[#allocation8 + $0x8] sm:$0xf]
          %v1585 = vld [vmem:[#allocation8 + $0xc] sm:$0xf]
          %v1586 = vld [vmem:[#allocation8 + $0x10] sm:$0xf]
          %v1587 = vld [vmem:[#allocation8 + $0x14] sm:$0xf]
          %v1588 = vld [vmem:[#allocation8 + $0x18] sm:$0xf]
          %v1589 = vld [vmem:[#allocation8 + $0x1c] sm:$0xf]
          %v1590 = vld [vmem:[#allocation8 + $0x20] sm:$0xf]
          %v1591 = vld [vmem:[#allocation8 + $0x24] sm:$0xf]
          %v1592 = vld [vmem:[#allocation8 + $0x28] sm:$0xf]
          %v1593 = vld [vmem:[#allocation8 + $0x2c] sm:$0xf]
          %v1594 = vld [vmem:[#allocation8 + $0x30] sm:$0xf]
          %v1595 = vld [vmem:[#allocation8 + $0x34] sm:$0xf]
          %v1596 = vld [vmem:[#allocation8 + $0x38] sm:$0xf]
          %v1597 = vld [vmem:[#allocation8 + $0x3c] sm:$0xf]
          %v1598 = vld [vmem:[#allocation8 + $0x40] sm:$0xf]
          %v1599 = vld [vmem:[#allocation8 + $0x44] sm:$0xf]
          %v1600 = vld [vmem:[#allocation8 + $0x48] sm:$0xf]
          %v1601 = vld [vmem:[#allocation8 + $0x4c] sm:$0xf]
          %v1602 = vld [vmem:[#allocation8 + $0x50] sm:$0xf]
          %v1603 = vld [vmem:[#allocation8 + $0x54] sm:$0xf]
          %v1604 = vld [vmem:[#allocation8 + $0x58] sm:$0xf]
          %v1605 = vld [vmem:[#allocation8 + $0x5c] sm:$0xf]
          %v1606 = vld [vmem:[#allocation8 + $0x60] sm:$0xf]
          %v1607 = vld [vmem:[#allocation8 + $0x64] sm:$0xf]
          %v1608 = vld [vmem:[#allocation8 + $0x68] sm:$0xf]
          %v1609 = vld [vmem:[#allocation8 + $0x6c] sm:$0xf]
          %v1610 = vld [vmem:[#allocation8 + $0x70] sm:$0xf]
          %v1611 = vld [vmem:[#allocation8 + $0x74] sm:$0xf]
          %v1612 = vld [vmem:[#allocation8 + $0x78] sm:$0xf]
          %v1613 = vld [vmem:[#allocation8 + $0x7c] sm:$0xf]
          %v1614 = vunpack.c.l.bf16 %v1582
          %v1615 = vunpack.c.l.bf16 %v1583
          %v1616 = vunpack.c.l.bf16 %v1584
          %v1617 = vunpack.c.l.bf16 %v1585
          %v1618 = vunpack.c.l.bf16 %v1586
          %v1619 = vunpack.c.l.bf16 %v1587
          %v1620 = vunpack.c.l.bf16 %v1588
          %v1621 = vunpack.c.l.bf16 %v1589
          %v1622 = vunpack.c.l.bf16 %v1590
          %v1623 = vunpack.c.l.bf16 %v1591
          %v1624 = vunpack.c.l.bf16 %v1592
          %v1625 = vunpack.c.l.bf16 %v1593
          %v1626 = vunpack.c.l.bf16 %v1594
          %v1627 = vunpack.c.l.bf16 %v1595
          %v1628 = vunpack.c.l.bf16 %v1596
          %v1629 = vunpack.c.l.bf16 %v1597
          %v1630 = vunpack.c.l.bf16 %v1598
          %v1631 = vunpack.c.l.bf16 %v1599
          %v1632 = vunpack.c.l.bf16 %v1600
          %v1633 = vunpack.c.l.bf16 %v1601
          %v1634 = vunpack.c.l.bf16 %v1602
          %v1635 = vunpack.c.l.bf16 %v1603
          %v1636 = vunpack.c.l.bf16 %v1604
          %v1637 = vunpack.c.l.bf16 %v1605
          %v1638 = vunpack.c.l.bf16 %v1606
          %v1639 = vunpack.c.l.bf16 %v1607
          %v1640 = vunpack.c.l.bf16 %v1608
          %v1641 = vunpack.c.l.bf16 %v1609
          %v1642 = vunpack.c.l.bf16 %v1610
          %v1643 = vunpack.c.l.bf16 %v1611
          %v1644 = vunpack.c.l.bf16 %v1612
          %v1645 = vunpack.c.l.bf16 %v1613
          %v1646 = vmul.f32 %v1550, %v1614
          %v1647 = vmul.f32 %v1551, %v1615
          %v1648 = vmul.f32 %v1552, %v1616
          %v1649 = vmul.f32 %v1553, %v1617
          %v1650 = vmul.f32 %v1554, %v1618
          %v1651 = vmul.f32 %v1555, %v1619
          %v1652 = vmul.f32 %v1556, %v1620
          %v1653 = vmul.f32 %v1557, %v1621
          %v1654 = vmul.f32 %v1558, %v1622
          %v1655 = vmul.f32 %v1559, %v1623
          %v1656 = vmul.f32 %v1560, %v1624
          %v1657 = vmul.f32 %v1561, %v1625
          %v1658 = vmul.f32 %v1562, %v1626
          %v1659 = vmul.f32 %v1563, %v1627
          %v1660 = vmul.f32 %v1564, %v1628
          %v1661 = vmul.f32 %v1565, %v1629
          %v1662 = vmul.f32 %v1566, %v1630
          %v1663 = vmul.f32 %v1567, %v1631
          %v1664 = vmul.f32 %v1568, %v1632
          %v1665 = vmul.f32 %v1569, %v1633
          %v1666 = vmul.f32 %v1570, %v1634
          %v1667 = vmul.f32 %v1571, %v1635
          %v1668 = vmul.f32 %v1572, %v1636
          %v1669 = vmul.f32 %v1573, %v1637
          %v1670 = vmul.f32 %v1574, %v1638
          %v1671 = vmul.f32 %v1575, %v1639
          %v1672 = vmul.f32 %v1576, %v1640
          %v1673 = vmul.f32 %v1577, %v1641
          %v1674 = vmul.f32 %v1578, %v1642
          %v1675 = vmul.f32 %v1579, %v1643
          %v1676 = vmul.f32 %v1580, %v1644
          %v1677 = vmul.f32 %v1581, %v1645
          %v1678 = vpack.c.bf16 %v1647, %v1646
          %v1679 = vpack.c.bf16 %v1649, %v1648
          %v1680 = vpack.c.bf16 %v1651, %v1650
          %v1681 = vpack.c.bf16 %v1653, %v1652
          %v1682 = vpack.c.bf16 %v1655, %v1654
          %v1683 = vpack.c.bf16 %v1657, %v1656
          %v1684 = vpack.c.bf16 %v1659, %v1658
          %v1685 = vpack.c.bf16 %v1661, %v1660
          %v1686 = vpack.c.bf16 %v1663, %v1662
          %v1687 = vpack.c.bf16 %v1665, %v1664
          %v1688 = vpack.c.bf16 %v1667, %v1666
          %v1689 = vpack.c.bf16 %v1669, %v1668
          %v1690 = vpack.c.bf16 %v1671, %v1670
          %v1691 = vpack.c.bf16 %v1673, %v1672
          %v1692 = vpack.c.bf16 %v1675, %v1674
          %v1693 = vpack.c.bf16 %v1677, %v1676
          %v1694 = vld [vmem:[#allocation9] sm:$0xff]
          %v1695 = vld [vmem:[#allocation9 + $0x8] sm:$0xff]
          %v1696 = vld [vmem:[#allocation9 + $0x10] sm:$0xff]
          %v1697 = vld [vmem:[#allocation9 + $0x18] sm:$0xff]
          %v1698 = vld [vmem:[#allocation9 + $0x20] sm:$0xff]
          %v1699 = vld [vmem:[#allocation9 + $0x28] sm:$0xff]
          %v1700 = vld [vmem:[#allocation9 + $0x30] sm:$0xff]
          %v1701 = vld [vmem:[#allocation9 + $0x38] sm:$0xff]
          %v1710 = vunpack.c.l.b16 %v1694
          %v1711 = vunpack.c.h.b16 %v1694
          %v1712 = vunpack.c.l.b16 %v1695
          %v1713 = vunpack.c.h.b16 %v1695
          %v1714 = vunpack.c.l.b16 %v1696
          %v1715 = vunpack.c.h.b16 %v1696
          %v1716 = vunpack.c.l.b16 %v1697
          %v1717 = vunpack.c.h.b16 %v1697
          %v1718 = vunpack.c.l.b16 %v1698
          %v1719 = vunpack.c.h.b16 %v1698
          %v1720 = vunpack.c.l.b16 %v1699
          %v1721 = vunpack.c.h.b16 %v1699
          %v1722 = vunpack.c.l.b16 %v1700
          %v1723 = vunpack.c.h.b16 %v1700
          %v1724 = vunpack.c.l.b16 %v1701
          %v1725 = vunpack.c.h.b16 %v1701
          %v1726 = vpack.c.b16 %v1712, %v1710
          %v1727 = vpack.c.b16 %v1713, %v1711
          %v1728 = vpack.c.b16 %v1716, %v1714
          %v1729 = vpack.c.b16 %v1717, %v1715
          %v1730 = vpack.c.b16 %v1720, %v1718
          %v1731 = vpack.c.b16 %v1721, %v1719
          %v1732 = vpack.c.b16 %v1724, %v1722
          %v1733 = vpack.c.b16 %v1725, %v1723
          %1742 = vmatprep.subr.bf16.mxu0 0
          %1743 = vmatpush1.bf16.msra.mxu0 %v1685
          %1744 = vmatprep.subr.bf16.mxu0 0
          %1745 = vmatpush1.bf16.msra.mxu0 %v1684
          %1746 = vmatprep.subr.bf16.mxu0 0
          %1747 = vmatpush1.bf16.msra.mxu0 %v1683
          %1748 = vmatprep.subr.bf16.mxu0 0
          %1749 = vmatpush1.bf16.msra.mxu0 %v1682
          %1750 = vmatprep.subr.bf16.mxu0 0
          %1751 = vmatpush1.bf16.msra.mxu0 %v1681
          %1752 = vmatprep.subr.bf16.mxu0 0
          %1753 = vmatpush1.bf16.msra.mxu0 %v1680
          %1754 = vmatprep.subr.bf16.mxu0 0
          %1755 = vmatpush1.bf16.msra.mxu0 %v1679
          %1756 = vmatprep.subr.bf16.mxu0 0
          %1757 = vmatpush1.bf16.msra.mxu0 %v1678
          %1758 = vmatprep.subr.bf16.mxu0 0
          %1759 = vmatpush2.bf16.msra.mxu0 %v1693
          %1760 = vmatprep.subr.bf16.mxu0 0
          %1761 = vmatpush2.bf16.msra.mxu0 %v1692
          %1762 = vmatprep.subr.bf16.mxu0 0
          %1763 = vmatpush2.bf16.msra.mxu0 %v1691
          %1764 = vmatprep.subr.bf16.mxu0 0
          %1765 = vmatpush2.bf16.msra.mxu0 %v1690
          %1766 = vmatprep.subr.bf16.mxu0 0
          %1767 = vmatpush2.bf16.msra.mxu0 %v1689
          %1768 = vmatprep.subr.bf16.mxu0 0
          %1769 = vmatpush2.bf16.msra.mxu0 %v1688
          %1770 = vmatprep.subr.bf16.mxu0 0
          %1771 = vmatpush2.bf16.msra.mxu0 %v1687
          %1772 = vmatprep.subr.bf16.mxu0 0
          %1773 = vmatpush2.bf16.msra.mxu0 %v1686
          %1774 = vmatprep.mubr.bf16.mxu0 %v1727
          %1775 = vmatmul.mubr.bf16.gmra.mxu0 %v1726
          %v1776 = vpop.f32.mrf.mxu0
          %v1777 = vadd.f32 0.0, %v1776
          %v1778 = vpop.f32.mrf.mxu0
          %v1779 = vpop.f32.mrf.mxu0
          %v1780 = vadd.f32 0.0, %v1779
          %v1781 = vpop.f32.mrf.mxu0
          %1782 = vmatprep.mubr.bf16.mxu0 %v1729
          %1783 = vmatmul.mubr.bf16.gmra.mxu0 %v1728
          %v1784 = vpop.f32.mrf.mxu0
          %v1785 = vadd.f32 0.0, %v1784
          %v1786 = vpop.f32.mrf.mxu0
          %v1787 = vpop.f32.mrf.mxu0
          %v1788 = vadd.f32 0.0, %v1787
          %v1789 = vpop.f32.mrf.mxu0
          %1790 = vmatprep.mubr.bf16.mxu0 %v1731
          %1791 = vmatmul.mubr.bf16.gmra.mxu0 %v1730
          %v1792 = vpop.f32.mrf.mxu0
          %v1793 = vadd.f32 0.0, %v1792
          %v1794 = vpop.f32.mrf.mxu0
          %v1795 = vpop.f32.mrf.mxu0
          %v1796 = vadd.f32 0.0, %v1795
          %v1797 = vpop.f32.mrf.mxu0
          %1798 = vmatprep.mubr.bf16.mxu0 %v1733
          %1799 = vmatmul.mubr.bf16.gmra.mxu0 %v1732
          %v1800 = vpop.f32.mrf.mxu0
          %v1801 = vadd.f32 0.0, %v1800
          %v1802 = vpop.f32.mrf.mxu0
          %v1803 = vpop.f32.mrf.mxu0
          %v1804 = vadd.f32 0.0, %v1803
          %v1805 = vpop.f32.mrf.mxu0
          %1806 = vdwg.mxu0
          %v1807 = vpack.c.bf16 %v1780, %v1777
          %v1808 = vpack.c.bf16 %v1788, %v1785
          %v1809 = vpack.c.bf16 %v1796, %v1793
          %v1810 = vpack.c.bf16 %v1804, %v1801
          %v1815 = vunpack.c.l.b16 %v1807
          %v1816 = vunpack.c.h.b16 %v1807
          %v1817 = vunpack.c.l.b16 %v1808
          %v1818 = vunpack.c.h.b16 %v1808
          %v1819 = vunpack.c.l.b16 %v1809
          %v1820 = vunpack.c.h.b16 %v1809
          %v1821 = vunpack.c.l.b16 %v1810
          %v1822 = vunpack.c.h.b16 %v1810
          %v1823 = vpack.c.b16 %v1815, %v1815
          %v1824 = vpack.c.b16 %v1816, %v1816
          %v1825 = vpack.c.b16 %v1817, %v1817
          %v1826 = vpack.c.b16 %v1818, %v1818
          %v1827 = vpack.c.b16 %v1819, %v1819
          %v1828 = vpack.c.b16 %v1820, %v1820
          %v1829 = vpack.c.b16 %v1821, %v1821
          %v1830 = vpack.c.b16 %v1822, %v1822
          %1839 = vst [vmem:[%s337] sm:$0xf] %v1823
          %1840 = vst [vmem:[%s337 + $0x4] sm:$0xf] %v1824
          %1841 = vst [vmem:[%s337 + $0x8] sm:$0xf] %v1825
          %1842 = vst [vmem:[%s337 + $0xc] sm:$0xf] %v1826
          %1843 = vst [vmem:[%s337 + $0x10] sm:$0xf] %v1827
          %1844 = vst [vmem:[%s337 + $0x14] sm:$0xf] %v1828
          %1845 = vst [vmem:[%s337 + $0x18] sm:$0xf] %v1829
          %1846 = vst [vmem:[%s337 + $0x1c] sm:$0xf] %v1830
        $region68: #{tpu_custom_call.1} parent=43 // pred_fallthru
          _
        %s1847 = sand.u32 %s183, 1
        %s1848 = scalar_lea.sflag [#allocation5], %s1847
        %s1849 = sand.u32 %s183, 1
        %s1850 = smul.addr %s1849, 32
        %s1851 = scalar_lea.vmem [#allocation11], %s1850
        // Predicated region
        $region69: #{tpu_custom_call.1} parent=43 // pred_check
          %p1852 = pneg %p193
        $region70: #{tpu_custom_call.1} parent=43 // pred_check_branch
          %1854 = sbr.rel (%p1852) target = $region72
        $region71: #{tpu_custom_call.1} parent=43 // pred_region
          %s1856 = ssub.s32 512, 512
          %1857 = vsyncadd %s1848, %s1856
          %s1858 = smul.addr %s29, 8
          %s1859 = smul.addr %s1858, 64
          %s1860 = scalar_lea.hbm %s6, %s1859
          %s1861 = sshll.u32 %s1851, 4
          %s1862 = int_to_ptr.vmem [resolvable:$true] %s1861
          %1867 = dma.vmem_to_hbm [thread:$0]  %s1862, 512, %s1860, %s1848, 64, 64, 4
        $region72: #{tpu_custom_call.1} parent=43 // pred_fallthru
          _
      $region44: #{tpu_custom_call.1} parent=5 // pred_fallthru
        _
      %p1868 = scmp.le.s32.totalorder 2, %s20
      // Predicated region
      $region73: #{tpu_custom_call.1} parent=5 // pred_check
        %p1869 = pneg %p1868
      $region74: #{tpu_custom_call.1} parent=5 // pred_check_branch
        %1871 = sbr.rel (%p1869) target = $region76
      $region75: #{tpu_custom_call.1} parent=5 // pred_region
        %s1872 = ssub.s32 %s20, 2
        // Predicated region
        $region77: #{tpu_custom_call.1} parent=75 // pred_check
          %p1873 = pneg %p199
        $region78: #{tpu_custom_call.1} parent=75 // pred_check_branch
          %1875 = sbr.rel (%p1873) target = $region80
        $region79: #{tpu_custom_call.1} parent=75 // pred_region
          %s1876 = sand.u32 %s184, 1
          %s1877 = scalar_lea.sflag [#allocation5], %s1876
          %s1878 = sand.u32 %s184, 1
          %s1879 = smul.addr %s1878, 32
          %s1880 = scalar_lea.vmem [#allocation11], %s1879
          %1881 = dma.done %s1877, 512
        $region80: #{tpu_custom_call.1} parent=75 // pred_fallthru
          _
      $region76: #{tpu_custom_call.1} parent=5 // pred_fallthru
        _
    $region6: #{tpu_custom_call.1} parent=1 // loop_footer
      %s24 = sadd.s32 1, %s20
    $region7: #{tpu_custom_call.1} parent=1 // loop_footer_branch
      %19 = sbr.rel target = $region3
    $region8: #{tpu_custom_call.1} parent=1 // loop_exit
      _
    %1882 = vsyncpa [#allocation4], 1
    %s1883 = scalar_lea.sflag [#allocation4], 1
    %1884 = vsyncpa %s1883, 1
    %1885 = vsyncpa [#allocation7], 1
    %1886 = vsyncpa [#allocation10], 1
    %1887 = vsyncpa [#allocation5], 1
    %s1888 = scalar_lea.sflag [#allocation5], 1
    %1889 = vsyncpa %s1888, 1

</llo_original>
